<compile_context>
chip_gen: v7x
topology: tpu7x:2x2x1
jax: 0.10.0
libtpu: 0.0.40
codegen_flags: <defaults>
</compile_context>

<pallas_src>
import functools
import numpy as np
import jax
import jax.numpy as jnp
from jax.experimental import pallas as pl
from jax.experimental.pallas import tpu as pltpu

# ----------------------------- config -------------------------------------
EMBED_SIZE = 32
HIDDEN_SIZE = 32
NUM_LAYERS = 2
VOCAB_SIZE = 50
VOCAB_PAD = 128                # vocab rounded up to one full 128-lane vreg
BATCH = 4
T_CAP = 7                      # caption length; LSTM sees T_CAP + 1 steps
LENGTHS = (8, 6, 5, 3)         # sorted descending, <= T_CAP + 1 (static tuple)


# ----------------------- fused decoder kernel ------------------------------
def _make_fused_decoder_kernel(Tp, B, H, num_layers):
    """Builds the fused multi-layer LSTM + output-linear kernel (all in VMEM).

    refs layout after x_ref:
      [w_ih_l (in_l,4H) bf16, w_hh_l (H,4H) bf16, b_l (1,4H) f32] * num_layers,
      lin_w (H, V_PAD) bf16, lin_b (1, V_PAD) f32, out_ref (Tp*B, V_PAD) f32
    Gate order is PyTorch's i, f, g, o; the g columns of all weights/biases are
    pre-scaled by 2 so tanh(z) = 2*sigmoid(2z) - 1 reuses the shared sigmoid.
    """
    def kernel(x_ref, *refs):
        lin_w_ref, lin_b_ref, out_ref = refs[3 * num_layers:]
        lin_w = lin_w_ref[...]            # (H, V_PAD) bf16
        lin_b = lin_b_ref[...]            # (1, V_PAD) f32

        seq = x_ref[...]                  # (Tp*B, E) f32, time-major rows
        for l in range(num_layers):
            wih = refs[3 * l][...]        # (in_l, 4H) bf16
            whh = refs[3 * l + 1][...]    # (H, 4H)    bf16
            bias = refs[3 * l + 2][...]   # (1, 4H)    f32

            # Hoisted input projection: one MXU issue for ALL Tp*B rows,
            # bias added once (no per-step broadcast in the unrolled body).
            xb = jnp.dot(seq.astype(jnp.bfloat16), wih,
                         preferred_element_type=jnp.float32) + bias

            h = jnp.zeros((B, H), jnp.float32)
            c = jnp.zeros((B, H), jnp.float32)
            hs = []
            for t in range(Tp):           # fully unrolled; serial chain is
                                          # only h_prev @ W_hh + gate math
                rec = jnp.dot(h.astype(jnp.bfloat16), whh,
                              preferred_element_type=jnp.float32)   # (B, 4H)
                gates = xb[t * B:(t + 1) * B, :] + rec
                sig = jax.nn.sigmoid(gates)            # one EUP pass, (B,4H)
                i_g = sig[:, 0:H]
                f_g = sig[:, H:2 * H]
                g_g = 2.0 * sig[:, 2 * H:3 * H] - 1.0  # tanh via 2*sig(2z)-1
                o_g = sig[:, 3 * H:4 * H]
                c = f_g * c + i_g * g_g
                h = o_g * jnp.tanh(c)
                hs.append(h)
            seq = jnp.concatenate(hs, axis=0)          # (Tp*B, H) f32

        # Hoisted output linear: one MXU issue + one unmasked lane-dense store.
        out_ref[...] = jnp.dot(seq.astype(jnp.bfloat16), lin_w,
                               preferred_element_type=jnp.float32) + lin_b
    return kernel


def _pack_params(params):
    """Pre-scale g-gate columns by 2 (tanh trick), cast MXU operands to bf16,
    pad the output linear to a full 128-lane vreg."""
    gscale = jnp.ones((1, 4 * HIDDEN_SIZE), jnp.float32)
    gscale = gscale.at[:, 2 * HIDDEN_SIZE:3 * HIDDEN_SIZE].set(2.0)
    args = []
    for l in range(NUM_LAYERS):
        args.append((params[f"w_ih_{l}"] * gscale).astype(jnp.bfloat16))
        args.append((params[f"w_hh_{l}"] * gscale).astype(jnp.bfloat16))
        args.append(params[f"b_{l}"] * gscale)                 # f32
    lin_w = jnp.zeros((HIDDEN_SIZE, VOCAB_PAD), jnp.float32)
    lin_w = lin_w.at[:, :VOCAB_SIZE].set(params["lin_w_t"]).astype(jnp.bfloat16)
    lin_b = jnp.zeros((1, VOCAB_PAD), jnp.float32)
    lin_b = lin_b.at[:, :VOCAB_SIZE].set(params["lin_b"])
    args += [lin_w, lin_b]
    return args


@functools.partial(jax.jit, static_argnames=("lengths",))
def decoder_forward(features, captions, lengths, params):
    # Embedding lookup + feature prepend (glue; gather stays in plain JAX).
    emb = params["embed_w"][captions]                          # (B, T, E)
    x = jnp.concatenate([features[:, None, :], emb], axis=1)   # (B, Tp, E)
    B, Tp, E = x.shape
    # Time-major, flattened to 2-D so every kernel matmul is a plain 2-D MXU op.
    x2d = jnp.transpose(x, (1, 0, 2)).reshape(Tp * B, E).astype(jnp.float32)

    kernel_args = [x2d] + _pack_params(params)
    vmem = pl.BlockSpec(memory_space=pltpu.MemorySpace.VMEM)   # whole array

    logits_full = pl.pallas_call(
        _make_fused_decoder_kernel(Tp, B, HIDDEN_SIZE, NUM_LAYERS),
        out_shape=jax.ShapeDtypeStruct((Tp * B, VOCAB_PAD), jnp.float32),
        in_specs=[vmem] * len(kernel_args),
        out_specs=vmem,
    )(*kernel_args)

    # pack_padded_sequence ordering: time-major, only rows with t < lengths[b].
    # Valid to skip the in-kernel length mask exactly because only these rows
    # are ever returned.
    # TODO(synk): packed reordering uses static host-side lengths (as PyTorch does).
    flat_idx = jnp.array([t * B + b for t in range(Tp) for b in range(B)
                          if t < lengths[b]], dtype=jnp.int32)
    return logits_full[flat_idx, :VOCAB_SIZE]


# ----------------------------- reference (pure JAX) -------------------------
def decoder_forward_ref(features, captions, lengths, params):
    emb = params["embed_w"][captions]
    x = jnp.concatenate([features[:, None, :], emb], axis=1)
    x = jnp.transpose(x, (1, 0, 2)).astype(jnp.float32)
    Tp, B, _ = x.shape
    lengths_arr = jnp.asarray(lengths, dtype=jnp.int32)
    mask = (jnp.arange(Tp)[:, None] < lengths_arr[None, :]).astype(jnp.float32)

    def layer(x_seq, w_ih_t, w_hh_t, bias):
        H = w_hh_t.shape[0]
        h = jnp.zeros((B, H), jnp.float32)
        c = jnp.zeros((B, H), jnp.float32)
        outs = []
        for t in range(Tp):
            gates = x_seq[t] @ w_ih_t + h @ w_hh_t + bias
            i = jax.nn.sigmoid(gates[:, :H])
            f = jax.nn.sigmoid(gates[:, H:2 * H])
            g = jnp.tanh(gates[:, 2 * H:3 * H])
            o = jax.nn.sigmoid(gates[:, 3 * H:])
            c_new = f * c + i * g
            h_new = o * jnp.tanh(c_new)
            m = mask[t][:, None]
            h = m * h_new + (1 - m) * h
            c = m * c_new + (1 - m) * c
            outs.append(h)
        return jnp.stack(outs, 0)

    h = x
    for l in range(NUM_LAYERS):
        h = layer(h, params[f"w_ih_{l}"], params[f"w_hh_{l}"], params[f"b_{l}"])

    idx_t, idx_b = [], []
    for t in range(Tp):
        for b in range(B):
            if t < lengths[b]:
                idx_t.append(t)
                idx_b.append(b)
    h_packed = h[jnp.array(idx_t), jnp.array(idx_b)]
    return h_packed @ params["lin_w_t"] + params["lin_b"]


# ----------------------------- parameter init -------------------------------
def init_params(key):
    params = {}
    k = 1.0 / np.sqrt(HIDDEN_SIZE)
    key, sub = jax.random.split(key)
    params["embed_w"] = jax.random.normal(sub, (VOCAB_SIZE, EMBED_SIZE),
                                          jnp.float32) * 0.1
    for l in range(NUM_LAYERS):
        in_dim = EMBED_SIZE if l == 0 else HIDDEN_SIZE
        key, k1, k2, k3, k4 = jax.random.split(key, 5)
        # Stored pre-transposed: (in, 4H) / (H, 4H); PyTorch gate order i,f,g,o.
        params[f"w_ih_{l}"] = jax.random.uniform(
            k1, (in_dim, 4 * HIDDEN_SIZE), jnp.float32, -k, k)
        params[f"w_hh_{l}"] = jax.random.uniform(
            k2, (HIDDEN_SIZE, 4 * HIDDEN_SIZE), jnp.float32, -k, k)
        b_ih = jax.random.uniform(k3, (4 * HIDDEN_SIZE,), jnp.float32, -k, k)
        b_hh = jax.random.uniform(k4, (4 * HIDDEN_SIZE,), jnp.float32, -k, k)
        params[f"b_{l}"] = (b_ih + b_hh)[None, :]             # (1, 4H)
    key, k5, k6 = jax.random.split(key, 3)
    params["lin_w_t"] = jax.random.uniform(
        k5, (HIDDEN_SIZE, VOCAB_SIZE), jnp.float32, -k, k)
    params["lin_b"] = jax.random.uniform(
        k6, (VOCAB_SIZE,), jnp.float32, -k, k)[None, :]       # (1, V)
    return params


# --------------------------------- main -------------------------------------
if __name__ == "__main__":
    root = jax.random.PRNGKey(0)
    k_params, k_feat, k_cap = jax.random.split(root, 3)

    params = init_params(k_params)
    features = jax.random.normal(k_feat, (BATCH, EMBED_SIZE), jnp.float32)
    captions = jax.random.randint(k_cap, (BATCH, T_CAP), 0, VOCAB_SIZE,
                                  dtype=jnp.int32)

    out = decoder_forward(features, captions, LENGTHS, params)
    out = jax.block_until_ready(out)

    ref = jax.block_until_ready(
        decoder_forward_ref(features, captions, LENGTHS, params))

    assert out.shape == (sum(LENGTHS), VOCAB_SIZE), out.shape
    # Kernel uses bf16 MXU operands (f32 accumulate); reference is plain f32
    # jnp.dot, so tolerance is loosened accordingly (per review).
    np.testing.assert_allclose(np.asarray(out), np.asarray(ref),
                               rtol=2e-2, atol=2e-2)
    print("KERNEL_OK")
</pallas_src>

<mosaic_0001>
module attributes {stable_mosaic.version = 11 : i64} {
  func.func @kernel(%arg0: memref<32x32xf32, #tpu.memory_space<vmem>>, %arg1: memref<32x128xbf16, #tpu.memory_space<vmem>>, %arg2: memref<32x128xbf16, #tpu.memory_space<vmem>>, %arg3: memref<1x128xf32, #tpu.memory_space<vmem>>, %arg4: memref<32x128xbf16, #tpu.memory_space<vmem>>, %arg5: memref<32x128xbf16, #tpu.memory_space<vmem>>, %arg6: memref<1x128xf32, #tpu.memory_space<vmem>>, %arg7: memref<32x128xbf16, #tpu.memory_space<vmem>>, %arg8: memref<1x128xf32, #tpu.memory_space<vmem>>, %arg9: memref<32x128xf32, #tpu.memory_space<vmem>>) attributes {dimension_semantics = [], scalar_prefetch = 0 : i64, scratch_operands = 0 : i64, tpu.core_type = #tpu.core_type<tc>} {
    %c0 = arith.constant 0 : index
    %c0_0 = arith.constant 0 : index
    %0 = vector.load %arg7[%c0, %c0_0] : memref<32x128xbf16, #tpu.memory_space<vmem>>, vector<32x128xbf16>
    %c0_1 = arith.constant 0 : index
    %c0_2 = arith.constant 0 : index
    %1 = vector.load %arg8[%c0_1, %c0_2] : memref<1x128xf32, #tpu.memory_space<vmem>>, vector<1x128xf32>
    %c0_3 = arith.constant 0 : index
    %c0_4 = arith.constant 0 : index
    %2 = vector.load %arg0[%c0_3, %c0_4] : memref<32x32xf32, #tpu.memory_space<vmem>>, vector<32x32xf32>
    %c0_5 = arith.constant 0 : index
    %c0_6 = arith.constant 0 : index
    %3 = vector.load %arg1[%c0_5, %c0_6] : memref<32x128xbf16, #tpu.memory_space<vmem>>, vector<32x128xbf16>
    %c0_7 = arith.constant 0 : index
    %c0_8 = arith.constant 0 : index
    %4 = vector.load %arg2[%c0_7, %c0_8] : memref<32x128xbf16, #tpu.memory_space<vmem>>, vector<32x128xbf16>
    %c0_9 = arith.constant 0 : index
    %c0_10 = arith.constant 0 : index
    %5 = vector.load %arg3[%c0_9, %c0_10] : memref<1x128xf32, #tpu.memory_space<vmem>>, vector<1x128xf32>
    %6 = arith.truncf %2 : vector<32x32xf32> to vector<32x32xbf16>
    %cst = arith.constant dense<0.000000e+00> : vector<32x128xf32>
    %7 = tpu.matmul %6, %3, %cst {dimension_numbers = #tpu.dot_dimension_numbers<[1], [0], [0], [1], [0, 0, 1, 1], [], []>} : vector<32x32xbf16>, vector<32x128xbf16>, vector<32x128xf32> -> vector<32x128xf32>
    %8 = vector.broadcast %5 : vector<1x128xf32> to vector<32x128xf32>
    %9 = arith.addf %7, %8 : vector<32x128xf32>
    %cst_11 = arith.constant 0.000000e+00 : f32
    %10 = vector.broadcast %cst_11 : f32 to vector<4x32xf32>
    %cst_12 = arith.constant 0.000000e+00 : f32
    %11 = vector.broadcast %cst_12 : f32 to vector<4x32xf32>
    %12 = arith.truncf %10 : vector<4x32xf32> to vector<4x32xbf16>
    %cst_13 = arith.constant dense<0.000000e+00> : vector<4x128xf32>
    %13 = tpu.matmul %12, %4, %cst_13 {dimension_numbers = #tpu.dot_dimension_numbers<[1], [0], [0], [1], [0, 0, 1, 1], [], []>} : vector<4x32xbf16>, vector<32x128xbf16>, vector<4x128xf32> -> vector<4x128xf32>
    %14 = vector.extract_strided_slice %9 {offsets = [0, 0], sizes = [4, 128], strides = [1, 1]} : vector<32x128xf32> to vector<4x128xf32>
    %15 = arith.addf %14, %13 : vector<4x128xf32>
    %16 = arith.negf %15 : vector<4x128xf32>
    %17 = math.exp %16 : vector<4x128xf32>
    %cst_14 = arith.constant 1.000000e+00 : f32
    %18 = vector.broadcast %cst_14 : f32 to vector<4x128xf32>
    %19 = arith.addf %18, %17 : vector<4x128xf32>
    %20 = arith.divf %18, %19 : vector<4x128xf32>
    %21 = vector.extract_strided_slice %20 {offsets = [0, 0], sizes = [4, 32], strides = [1, 1]} : vector<4x128xf32> to vector<4x32xf32>
    %22 = vector.extract_strided_slice %20 {offsets = [0, 32], sizes = [4, 32], strides = [1, 1]} : vector<4x128xf32> to vector<4x32xf32>
    %23 = vector.extract_strided_slice %20 {offsets = [0, 64], sizes = [4, 32], strides = [1, 1]} : vector<4x128xf32> to vector<4x32xf32>
    %cst_15 = arith.constant 2.000000e+00 : f32
    %24 = vector.broadcast %cst_15 : f32 to vector<4x32xf32>
    %25 = arith.mulf %24, %23 : vector<4x32xf32>
    %cst_16 = arith.constant 1.000000e+00 : f32
    %26 = vector.broadcast %cst_16 : f32 to vector<4x32xf32>
    %27 = arith.subf %25, %26 : vector<4x32xf32>
    %28 = vector.extract_strided_slice %20 {offsets = [0, 96], sizes = [4, 32], strides = [1, 1]} : vector<4x128xf32> to vector<4x32xf32>
    %29 = arith.mulf %22, %11 : vector<4x32xf32>
    %30 = arith.mulf %21, %27 : vector<4x32xf32>
    %31 = arith.addf %29, %30 : vector<4x32xf32>
    %32 = math.tanh %31 : vector<4x32xf32>
    %33 = arith.mulf %28, %32 : vector<4x32xf32>
    %34 = arith.truncf %33 : vector<4x32xf32> to vector<4x32xbf16>
    %cst_17 = arith.constant dense<0.000000e+00> : vector<4x128xf32>
    %35 = tpu.matmul %34, %4, %cst_17 {dimension_numbers = #tpu.dot_dimension_numbers<[1], [0], [0], [1], [0, 0, 1, 1], [], []>} : vector<4x32xbf16>, vector<32x128xbf16>, vector<4x128xf32> -> vector<4x128xf32>
    %36 = vector.extract_strided_slice %9 {offsets = [4, 0], sizes = [4, 128], strides = [1, 1]} : vector<32x128xf32> to vector<4x128xf32>
    %37 = arith.addf %36, %35 : vector<4x128xf32>
    %38 = arith.negf %37 : vector<4x128xf32>
    %39 = math.exp %38 : vector<4x128xf32>
    %cst_18 = arith.constant 1.000000e+00 : f32
    %40 = vector.broadcast %cst_18 : f32 to vector<4x128xf32>
    %41 = arith.addf %40, %39 : vector<4x128xf32>
    %42 = arith.divf %40, %41 : vector<4x128xf32>
    %43 = vector.extract_strided_slice %42 {offsets = [0, 0], sizes = [4, 32], strides = [1, 1]} : vector<4x128xf32> to vector<4x32xf32>
    %44 = vector.extract_strided_slice %42 {offsets = [0, 32], sizes = [4, 32], strides = [1, 1]} : vector<4x128xf32> to vector<4x32xf32>
    %45 = vector.extract_strided_slice %42 {offsets = [0, 64], sizes = [4, 32], strides = [1, 1]} : vector<4x128xf32> to vector<4x32xf32>
    %cst_19 = arith.constant 2.000000e+00 : f32
    %46 = vector.broadcast %cst_19 : f32 to vector<4x32xf32>
    %47 = arith.mulf %46, %45 : vector<4x32xf32>
    %cst_20 = arith.constant 1.000000e+00 : f32
    %48 = vector.broadcast %cst_20 : f32 to vector<4x32xf32>
    %49 = arith.subf %47, %48 : vector<4x32xf32>
    %50 = vector.extract_strided_slice %42 {offsets = [0, 96], sizes = [4, 32], strides = [1, 1]} : vector<4x128xf32> to vector<4x32xf32>
    %51 = arith.mulf %44, %31 : vector<4x32xf32>
    %52 = arith.mulf %43, %49 : vector<4x32xf32>
    %53 = arith.addf %51, %52 : vector<4x32xf32>
    %54 = math.tanh %53 : vector<4x32xf32>
    %55 = arith.mulf %50, %54 : vector<4x32xf32>
    %56 = arith.truncf %55 : vector<4x32xf32> to vector<4x32xbf16>
    %cst_21 = arith.constant dense<0.000000e+00> : vector<4x128xf32>
    %57 = tpu.matmul %56, %4, %cst_21 {dimension_numbers = #tpu.dot_dimension_numbers<[1], [0], [0], [1], [0, 0, 1, 1], [], []>} : vector<4x32xbf16>, vector<32x128xbf16>, vector<4x128xf32> -> vector<4x128xf32>
    %58 = vector.extract_strided_slice %9 {offsets = [8, 0], sizes = [4, 128], strides = [1, 1]} : vector<32x128xf32> to vector<4x128xf32>
    %59 = arith.addf %58, %57 : vector<4x128xf32>
    %60 = arith.negf %59 : vector<4x128xf32>
    %61 = math.exp %60 : vector<4x128xf32>
    %cst_22 = arith.constant 1.000000e+00 : f32
    %62 = vector.broadcast %cst_22 : f32 to vector<4x128xf32>
    %63 = arith.addf %62, %61 : vector<4x128xf32>
    %64 = arith.divf %62, %63 : vector<4x128xf32>
    %65 = vector.extract_strided_slice %64 {offsets = [0, 0], sizes = [4, 32], strides = [1, 1]} : vector<4x128xf32> to vector<4x32xf32>
    %66 = vector.extract_strided_slice %64 {offsets = [0, 32], sizes = [4, 32], strides = [1, 1]} : vector<4x128xf32> to vector<4x32xf32>
    %67 = vector.extract_strided_slice %64 {offsets = [0, 64], sizes = [4, 32], strides = [1, 1]} : vector<4x128xf32> to vector<4x32xf32>
    %cst_23 = arith.constant 2.000000e+00 : f32
    %68 = vector.broadcast %cst_23 : f32 to vector<4x32xf32>
    %69 = arith.mulf %68, %67 : vector<4x32xf32>
    %cst_24 = arith.constant 1.000000e+00 : f32
    %70 = vector.broadcast %cst_24 : f32 to vector<4x32xf32>
    %71 = arith.subf %69, %70 : vector<4x32xf32>
    %72 = vector.extract_strided_slice %64 {offsets = [0, 96], sizes = [4, 32], strides = [1, 1]} : vector<4x128xf32> to vector<4x32xf32>
    %73 = arith.mulf %66, %53 : vector<4x32xf32>
    %74 = arith.mulf %65, %71 : vector<4x32xf32>
    %75 = arith.addf %73, %74 : vector<4x32xf32>
    %76 = math.tanh %75 : vector<4x32xf32>
    %77 = arith.mulf %72, %76 : vector<4x32xf32>
    %78 = arith.truncf %77 : vector<4x32xf32> to vector<4x32xbf16>
    %cst_25 = arith.constant dense<0.000000e+00> : vector<4x128xf32>
    %79 = tpu.matmul %78, %4, %cst_25 {dimension_numbers = #tpu.dot_dimension_numbers<[1], [0], [0], [1], [0, 0, 1, 1], [], []>} : vector<4x32xbf16>, vector<32x128xbf16>, vector<4x128xf32> -> vector<4x128xf32>
    %80 = vector.extract_strided_slice %9 {offsets = [12, 0], sizes = [4, 128], strides = [1, 1]} : vector<32x128xf32> to vector<4x128xf32>
    %81 = arith.addf %80, %79 : vector<4x128xf32>
    %82 = arith.negf %81 : vector<4x128xf32>
    %83 = math.exp %82 : vector<4x128xf32>
    %cst_26 = arith.constant 1.000000e+00 : f32
    %84 = vector.broadcast %cst_26 : f32 to vector<4x128xf32>
    %85 = arith.addf %84, %83 : vector<4x128xf32>
    %86 = arith.divf %84, %85 : vector<4x128xf32>
    %87 = vector.extract_strided_slice %86 {offsets = [0, 0], sizes = [4, 32], strides = [1, 1]} : vector<4x128xf32> to vector<4x32xf32>
    %88 = vector.extract_strided_slice %86 {offsets = [0, 32], sizes = [4, 32], strides = [1, 1]} : vector<4x128xf32> to vector<4x32xf32>
    %89 = vector.extract_strided_slice %86 {offsets = [0, 64], sizes = [4, 32], strides = [1, 1]} : vector<4x128xf32> to vector<4x32xf32>
    %cst_27 = arith.constant 2.000000e+00 : f32
    %90 = vector.broadcast %cst_27 : f32 to vector<4x32xf32>
    %91 = arith.mulf %90, %89 : vector<4x32xf32>
    %cst_28 = arith.constant 1.000000e+00 : f32
    %92 = vector.broadcast %cst_28 : f32 to vector<4x32xf32>
    %93 = arith.subf %91, %92 : vector<4x32xf32>
    %94 = vector.extract_strided_slice %86 {offsets = [0, 96], sizes = [4, 32], strides = [1, 1]} : vector<4x128xf32> to vector<4x32xf32>
    %95 = arith.mulf %88, %75 : vector<4x32xf32>
    %96 = arith.mulf %87, %93 : vector<4x32xf32>
    %97 = arith.addf %95, %96 : vector<4x32xf32>
    %98 = math.tanh %97 : vector<4x32xf32>
    %99 = arith.mulf %94, %98 : vector<4x32xf32>
    %100 = arith.truncf %99 : vector<4x32xf32> to vector<4x32xbf16>
    %cst_29 = arith.constant dense<0.000000e+00> : vector<4x128xf32>
    %101 = tpu.matmul %100, %4, %cst_29 {dimension_numbers = #tpu.dot_dimension_numbers<[1], [0], [0], [1], [0, 0, 1, 1], [], []>} : vector<4x32xbf16>, vector<32x128xbf16>, vector<4x128xf32> -> vector<4x128xf32>
    %102 = vector.extract_strided_slice %9 {offsets = [16, 0], sizes = [4, 128], strides = [1, 1]} : vector<32x128xf32> to vector<4x128xf32>
    %103 = arith.addf %102, %101 : vector<4x128xf32>
    %104 = arith.negf %103 : vector<4x128xf32>
    %105 = math.exp %104 : vector<4x128xf32>
    %cst_30 = arith.constant 1.000000e+00 : f32
    %106 = vector.broadcast %cst_30 : f32 to vector<4x128xf32>
    %107 = arith.addf %106, %105 : vector<4x128xf32>
    %108 = arith.divf %106, %107 : vector<4x128xf32>
    %109 = vector.extract_strided_slice %108 {offsets = [0, 0], sizes = [4, 32], strides = [1, 1]} : vector<4x128xf32> to vector<4x32xf32>
    %110 = vector.extract_strided_slice %108 {offsets = [0, 32], sizes = [4, 32], strides = [1, 1]} : vector<4x128xf32> to vector<4x32xf32>
    %111 = vector.extract_strided_slice %108 {offsets = [0, 64], sizes = [4, 32], strides = [1, 1]} : vector<4x128xf32> to vector<4x32xf32>
    %cst_31 = arith.constant 2.000000e+00 : f32
    %112 = vector.broadcast %cst_31 : f32 to vector<4x32xf32>
    %113 = arith.mulf %112, %111 : vector<4x32xf32>
    %cst_32 = arith.constant 1.000000e+00 : f32
    %114 = vector.broadcast %cst_32 : f32 to vector<4x32xf32>
    %115 = arith.subf %113, %114 : vector<4x32xf32>
    %116 = vector.extract_strided_slice %108 {offsets = [0, 96], sizes = [4, 32], strides = [1, 1]} : vector<4x128xf32> to vector<4x32xf32>
    %117 = arith.mulf %110, %97 : vector<4x32xf32>
    %118 = arith.mulf %109, %115 : vector<4x32xf32>
    %119 = arith.addf %117, %118 : vector<4x32xf32>
    %120 = math.tanh %119 : vector<4x32xf32>
    %121 = arith.mulf %116, %120 : vector<4x32xf32>
    %122 = arith.truncf %121 : vector<4x32xf32> to vector<4x32xbf16>
    %cst_33 = arith.constant dense<0.000000e+00> : vector<4x128xf32>
    %123 = tpu.matmul %122, %4, %cst_33 {dimension_numbers = #tpu.dot_dimension_numbers<[1], [0], [0], [1], [0, 0, 1, 1], [], []>} : vector<4x32xbf16>, vector<32x128xbf16>, vector<4x128xf32> -> vector<4x128xf32>
    %124 = vector.extract_strided_slice %9 {offsets = [20, 0], sizes = [4, 128], strides = [1, 1]} : vector<32x128xf32> to vector<4x128xf32>
    %125 = arith.addf %124, %123 : vector<4x128xf32>
    %126 = arith.negf %125 : vector<4x128xf32>
    %127 = math.exp %126 : vector<4x128xf32>
    %cst_34 = arith.constant 1.000000e+00 : f32
    %128 = vector.broadcast %cst_34 : f32 to vector<4x128xf32>
    %129 = arith.addf %128, %127 : vector<4x128xf32>
    %130 = arith.divf %128, %129 : vector<4x128xf32>
    %131 = vector.extract_strided_slice %130 {offsets = [0, 0], sizes = [4, 32], strides = [1, 1]} : vector<4x128xf32> to vector<4x32xf32>
    %132 = vector.extract_strided_slice %130 {offsets = [0, 32], sizes = [4, 32], strides = [1, 1]} : vector<4x128xf32> to vector<4x32xf32>
    %133 = vector.extract_strided_slice %130 {offsets = [0, 64], sizes = [4, 32], strides = [1, 1]} : vector<4x128xf32> to vector<4x32xf32>
    %cst_35 = arith.constant 2.000000e+00 : f32
    %134 = vector.broadcast %cst_35 : f32 to vector<4x32xf32>
    %135 = arith.mulf %134, %133 : vector<4x32xf32>
    %cst_36 = arith.constant 1.000000e+00 : f32
    %136 = vector.broadcast %cst_36 : f32 to vector<4x32xf32>
    %137 = arith.subf %135, %136 : vector<4x32xf32>
    %138 = vector.extract_strided_slice %130 {offsets = [0, 96], sizes = [4, 32], strides = [1, 1]} : vector<4x128xf32> to vector<4x32xf32>
    %139 = arith.mulf %132, %119 : vector<4x32xf32>
    %140 = arith.mulf %131, %137 : vector<4x32xf32>
    %141 = arith.addf %139, %140 : vector<4x32xf32>
    %142 = math.tanh %141 : vector<4x32xf32>
    %143 = arith.mulf %138, %142 : vector<4x32xf32>
    %144 = arith.truncf %143 : vector<4x32xf32> to vector<4x32xbf16>
    %cst_37 = arith.constant dense<0.000000e+00> : vector<4x128xf32>
    %145 = tpu.matmul %144, %4, %cst_37 {dimension_numbers = #tpu.dot_dimension_numbers<[1], [0], [0], [1], [0, 0, 1, 1], [], []>} : vector<4x32xbf16>, vector<32x128xbf16>, vector<4x128xf32> -> vector<4x128xf32>
    %146 = vector.extract_strided_slice %9 {offsets = [24, 0], sizes = [4, 128], strides = [1, 1]} : vector<32x128xf32> to vector<4x128xf32>
    %147 = arith.addf %146, %145 : vector<4x128xf32>
    %148 = arith.negf %147 : vector<4x128xf32>
    %149 = math.exp %148 : vector<4x128xf32>
    %cst_38 = arith.constant 1.000000e+00 : f32
    %150 = vector.broadcast %cst_38 : f32 to vector<4x128xf32>
    %151 = arith.addf %150, %149 : vector<4x128xf32>
    %152 = arith.divf %150, %151 : vector<4x128xf32>
    %153 = vector.extract_strided_slice %152 {offsets = [0, 0], sizes = [4, 32], strides = [1, 1]} : vector<4x128xf32> to vector<4x32xf32>
    %154 = vector.extract_strided_slice %152 {offsets = [0, 32], sizes = [4, 32], strides = [1, 1]} : vector<4x128xf32> to vector<4x32xf32>
    %155 = vector.extract_strided_slice %152 {offsets = [0, 64], sizes = [4, 32], strides = [1, 1]} : vector<4x128xf32> to vector<4x32xf32>
    %cst_39 = arith.constant 2.000000e+00 : f32
    %156 = vector.broadcast %cst_39 : f32 to vector<4x32xf32>
    %157 = arith.mulf %156, %155 : vector<4x32xf32>
    %cst_40 = arith.constant 1.000000e+00 : f32
    %158 = vector.broadcast %cst_40 : f32 to vector<4x32xf32>
    %159 = arith.subf %157, %158 : vector<4x32xf32>
    %160 = vector.extract_strided_slice %152 {offsets = [0, 96], sizes = [4, 32], strides = [1, 1]} : vector<4x128xf32> to vector<4x32xf32>
    %161 = arith.mulf %154, %141 : vector<4x32xf32>
    %162 = arith.mulf %153, %159 : vector<4x32xf32>
    %163 = arith.addf %161, %162 : vector<4x32xf32>
    %164 = math.tanh %163 : vector<4x32xf32>
    %165 = arith.mulf %160, %164 : vector<4x32xf32>
    %166 = arith.truncf %165 : vector<4x32xf32> to vector<4x32xbf16>
    %cst_41 = arith.constant dense<0.000000e+00> : vector<4x128xf32>
    %167 = tpu.matmul %166, %4, %cst_41 {dimension_numbers = #tpu.dot_dimension_numbers<[1], [0], [0], [1], [0, 0, 1, 1], [], []>} : vector<4x32xbf16>, vector<32x128xbf16>, vector<4x128xf32> -> vector<4x128xf32>
    %168 = vector.extract_strided_slice %9 {offsets = [28, 0], sizes = [4, 128], strides = [1, 1]} : vector<32x128xf32> to vector<4x128xf32>
    %169 = arith.addf %168, %167 : vector<4x128xf32>
    %170 = arith.negf %169 : vector<4x128xf32>
    %171 = math.exp %170 : vector<4x128xf32>
    %cst_42 = arith.constant 1.000000e+00 : f32
    %172 = vector.broadcast %cst_42 : f32 to vector<4x128xf32>
    %173 = arith.addf %172, %171 : vector<4x128xf32>
    %174 = arith.divf %172, %173 : vector<4x128xf32>
    %175 = vector.extract_strided_slice %174 {offsets = [0, 0], sizes = [4, 32], strides = [1, 1]} : vector<4x128xf32> to vector<4x32xf32>
    %176 = vector.extract_strided_slice %174 {offsets = [0, 32], sizes = [4, 32], strides = [1, 1]} : vector<4x128xf32> to vector<4x32xf32>
    %177 = vector.extract_strided_slice %174 {offsets = [0, 64], sizes = [4, 32], strides = [1, 1]} : vector<4x128xf32> to vector<4x32xf32>
    %cst_43 = arith.constant 2.000000e+00 : f32
    %178 = vector.broadcast %cst_43 : f32 to vector<4x32xf32>
    %179 = arith.mulf %178, %177 : vector<4x32xf32>
    %cst_44 = arith.constant 1.000000e+00 : f32
    %180 = vector.broadcast %cst_44 : f32 to vector<4x32xf32>
    %181 = arith.subf %179, %180 : vector<4x32xf32>
    %182 = vector.extract_strided_slice %174 {offsets = [0, 96], sizes = [4, 32], strides = [1, 1]} : vector<4x128xf32> to vector<4x32xf32>
    %183 = arith.mulf %176, %163 : vector<4x32xf32>
    %184 = arith.mulf %175, %181 : vector<4x32xf32>
    %185 = arith.addf %183, %184 : vector<4x32xf32>
    %186 = math.tanh %185 : vector<4x32xf32>
    %187 = arith.mulf %182, %186 : vector<4x32xf32>
    %188 = tpu.concatenate %33, %55, %77, %99, %121, %143, %165, %187 in 0 : vector<4x32xf32>, vector<4x32xf32>, vector<4x32xf32>, vector<4x32xf32>, vector<4x32xf32>, vector<4x32xf32>, vector<4x32xf32>, vector<4x32xf32> -> vector<32x32xf32>
    %c0_45 = arith.constant 0 : index
    %c0_46 = arith.constant 0 : index
    %189 = vector.load %arg4[%c0_45, %c0_46] : memref<32x128xbf16, #tpu.memory_space<vmem>>, vector<32x128xbf16>
    %c0_47 = arith.constant 0 : index
    %c0_48 = arith.constant 0 : index
    %190 = vector.load %arg5[%c0_47, %c0_48] : memref<32x128xbf16, #tpu.memory_space<vmem>>, vector<32x128xbf16>
    %c0_49 = arith.constant 0 : index
    %c0_50 = arith.constant 0 : index
    %191 = vector.load %arg6[%c0_49, %c0_50] : memref<1x128xf32, #tpu.memory_space<vmem>>, vector<1x128xf32>
    %192 = arith.truncf %188 : vector<32x32xf32> to vector<32x32xbf16>
    %cst_51 = arith.constant dense<0.000000e+00> : vector<32x128xf32>
    %193 = tpu.matmul %192, %189, %cst_51 {dimension_numbers = #tpu.dot_dimension_numbers<[1], [0], [0], [1], [0, 0, 1, 1], [], []>} : vector<32x32xbf16>, vector<32x128xbf16>, vector<32x128xf32> -> vector<32x128xf32>
    %194 = vector.broadcast %191 : vector<1x128xf32> to vector<32x128xf32>
    %195 = arith.addf %193, %194 : vector<32x128xf32>
    %cst_52 = arith.constant 0.000000e+00 : f32
    %196 = vector.broadcast %cst_52 : f32 to vector<4x32xf32>
    %cst_53 = arith.constant 0.000000e+00 : f32
    %197 = vector.broadcast %cst_53 : f32 to vector<4x32xf32>
    %198 = arith.truncf %196 : vector<4x32xf32> to vector<4x32xbf16>
    %cst_54 = arith.constant dense<0.000000e+00> : vector<4x128xf32>
    %199 = tpu.matmul %198, %190, %cst_54 {dimension_numbers = #tpu.dot_dimension_numbers<[1], [0], [0], [1], [0, 0, 1, 1], [], []>} : vector<4x32xbf16>, vector<32x128xbf16>, vector<4x128xf32> -> vector<4x128xf32>
    %200 = vector.extract_strided_slice %195 {offsets = [0, 0], sizes = [4, 128], strides = [1, 1]} : vector<32x128xf32> to vector<4x128xf32>
    %201 = arith.addf %200, %199 : vector<4x128xf32>
    %202 = arith.negf %201 : vector<4x128xf32>
    %203 = math.exp %202 : vector<4x128xf32>
    %cst_55 = arith.constant 1.000000e+00 : f32
    %204 = vector.broadcast %cst_55 : f32 to vector<4x128xf32>
    %205 = arith.addf %204, %203 : vector<4x128xf32>
    %206 = arith.divf %204, %205 : vector<4x128xf32>
    %207 = vector.extract_strided_slice %206 {offsets = [0, 0], sizes = [4, 32], strides = [1, 1]} : vector<4x128xf32> to vector<4x32xf32>
    %208 = vector.extract_strided_slice %206 {offsets = [0, 32], sizes = [4, 32], strides = [1, 1]} : vector<4x128xf32> to vector<4x32xf32>
    %209 = vector.extract_strided_slice %206 {offsets = [0, 64], sizes = [4, 32], strides = [1, 1]} : vector<4x128xf32> to vector<4x32xf32>
    %cst_56 = arith.constant 2.000000e+00 : f32
    %210 = vector.broadcast %cst_56 : f32 to vector<4x32xf32>
    %211 = arith.mulf %210, %209 : vector<4x32xf32>
    %cst_57 = arith.constant 1.000000e+00 : f32
    %212 = vector.broadcast %cst_57 : f32 to vector<4x32xf32>
    %213 = arith.subf %211, %212 : vector<4x32xf32>
    %214 = vector.extract_strided_slice %206 {offsets = [0, 96], sizes = [4, 32], strides = [1, 1]} : vector<4x128xf32> to vector<4x32xf32>
    %215 = arith.mulf %208, %197 : vector<4x32xf32>
    %216 = arith.mulf %207, %213 : vector<4x32xf32>
    %217 = arith.addf %215, %216 : vector<4x32xf32>
    %218 = math.tanh %217 : vector<4x32xf32>
    %219 = arith.mulf %214, %218 : vector<4x32xf32>
    %220 = arith.truncf %219 : vector<4x32xf32> to vector<4x32xbf16>
    %cst_58 = arith.constant dense<0.000000e+00> : vector<4x128xf32>
    %221 = tpu.matmul %220, %190, %cst_58 {dimension_numbers = #tpu.dot_dimension_numbers<[1], [0], [0], [1], [0, 0, 1, 1], [], []>} : vector<4x32xbf16>, vector<32x128xbf16>, vector<4x128xf32> -> vector<4x128xf32>
    %222 = vector.extract_strided_slice %195 {offsets = [4, 0], sizes = [4, 128], strides = [1, 1]} : vector<32x128xf32> to vector<4x128xf32>
    %223 = arith.addf %222, %221 : vector<4x128xf32>
    %224 = arith.negf %223 : vector<4x128xf32>
    %225 = math.exp %224 : vector<4x128xf32>
    %cst_59 = arith.constant 1.000000e+00 : f32
    %226 = vector.broadcast %cst_59 : f32 to vector<4x128xf32>
    %227 = arith.addf %226, %225 : vector<4x128xf32>
    %228 = arith.divf %226, %227 : vector<4x128xf32>
    %229 = vector.extract_strided_slice %228 {offsets = [0, 0], sizes = [4, 32], strides = [1, 1]} : vector<4x128xf32> to vector<4x32xf32>
    %230 = vector.extract_strided_slice %228 {offsets = [0, 32], sizes = [4, 32], strides = [1, 1]} : vector<4x128xf32> to vector<4x32xf32>
    %231 = vector.extract_strided_slice %228 {offsets = [0, 64], sizes = [4, 32], strides = [1, 1]} : vector<4x128xf32> to vector<4x32xf32>
    %cst_60 = arith.constant 2.000000e+00 : f32
    %232 = vector.broadcast %cst_60 : f32 to vector<4x32xf32>
    %233 = arith.mulf %232, %231 : vector<4x32xf32>
    %cst_61 = arith.constant 1.000000e+00 : f32
    %234 = vector.broadcast %cst_61 : f32 to vector<4x32xf32>
    %235 = arith.subf %233, %234 : vector<4x32xf32>
    %236 = vector.extract_strided_slice %228 {offsets = [0, 96], sizes = [4, 32], strides = [1, 1]} : vector<4x128xf32> to vector<4x32xf32>
    %237 = arith.mulf %230, %217 : vector<4x32xf32>
    %238 = arith.mulf %229, %235 : vector<4x32xf32>
    %239 = arith.addf %237, %238 : vector<4x32xf32>
    %240 = math.tanh %239 : vector<4x32xf32>
    %241 = arith.mulf %236, %240 : vector<4x32xf32>
    %242 = arith.truncf %241 : vector<4x32xf32> to vector<4x32xbf16>
    %cst_62 = arith.constant dense<0.000000e+00> : vector<4x128xf32>
    %243 = tpu.matmul %242, %190, %cst_62 {dimension_numbers = #tpu.dot_dimension_numbers<[1], [0], [0], [1], [0, 0, 1, 1], [], []>} : vector<4x32xbf16>, vector<32x128xbf16>, vector<4x128xf32> -> vector<4x128xf32>
    %244 = vector.extract_strided_slice %195 {offsets = [8, 0], sizes = [4, 128], strides = [1, 1]} : vector<32x128xf32> to vector<4x128xf32>
    %245 = arith.addf %244, %243 : vector<4x128xf32>
    %246 = arith.negf %245 : vector<4x128xf32>
    %247 = math.exp %246 : vector<4x128xf32>
    %cst_63 = arith.constant 1.000000e+00 : f32
    %248 = vector.broadcast %cst_63 : f32 to vector<4x128xf32>
    %249 = arith.addf %248, %247 : vector<4x128xf32>
    %250 = arith.divf %248, %249 : vector<4x128xf32>
    %251 = vector.extract_strided_slice %250 {offsets = [0, 0], sizes = [4, 32], strides = [1, 1]} : vector<4x128xf32> to vector<4x32xf32>
    %252 = vector.extract_strided_slice %250 {offsets = [0, 32], sizes = [4, 32], strides = [1, 1]} : vector<4x128xf32> to vector<4x32xf32>
    %253 = vector.extract_strided_slice %250 {offsets = [0, 64], sizes = [4, 32], strides = [1, 1]} : vector<4x128xf32> to vector<4x32xf32>
    %cst_64 = arith.constant 2.000000e+00 : f32
    %254 = vector.broadcast %cst_64 : f32 to vector<4x32xf32>
    %255 = arith.mulf %254, %253 : vector<4x32xf32>
    %cst_65 = arith.constant 1.000000e+00 : f32
    %256 = vector.broadcast %cst_65 : f32 to vector<4x32xf32>
    %257 = arith.subf %255, %256 : vector<4x32xf32>
    %258 = vector.extract_strided_slice %250 {offsets = [0, 96], sizes = [4, 32], strides = [1, 1]} : vector<4x128xf32> to vector<4x32xf32>
    %259 = arith.mulf %252, %239 : vector<4x32xf32>
    %260 = arith.mulf %251, %257 : vector<4x32xf32>
    %261 = arith.addf %259, %260 : vector<4x32xf32>
    %262 = math.tanh %261 : vector<4x32xf32>
    %263 = arith.mulf %258, %262 : vector<4x32xf32>
    %264 = arith.truncf %263 : vector<4x32xf32> to vector<4x32xbf16>
    %cst_66 = arith.constant dense<0.000000e+00> : vector<4x128xf32>
    %265 = tpu.matmul %264, %190, %cst_66 {dimension_numbers = #tpu.dot_dimension_numbers<[1], [0], [0], [1], [0, 0, 1, 1], [], []>} : vector<4x32xbf16>, vector<32x128xbf16>, vector<4x128xf32> -> vector<4x128xf32>
    %266 = vector.extract_strided_slice %195 {offsets = [12, 0], sizes = [4, 128], strides = [1, 1]} : vector<32x128xf32> to vector<4x128xf32>
    %267 = arith.addf %266, %265 : vector<4x128xf32>
    %268 = arith.negf %267 : vector<4x128xf32>
    %269 = math.exp %268 : vector<4x128xf32>
    %cst_67 = arith.constant 1.000000e+00 : f32
    %270 = vector.broadcast %cst_67 : f32 to vector<4x128xf32>
    %271 = arith.addf %270, %269 : vector<4x128xf32>
    %272 = arith.divf %270, %271 : vector<4x128xf32>
    %273 = vector.extract_strided_slice %272 {offsets = [0, 0], sizes = [4, 32], strides = [1, 1]} : vector<4x128xf32> to vector<4x32xf32>
    %274 = vector.extract_strided_slice %272 {offsets = [0, 32], sizes = [4, 32], strides = [1, 1]} : vector<4x128xf32> to vector<4x32xf32>
    %275 = vector.extract_strided_slice %272 {offsets = [0, 64], sizes = [4, 32], strides = [1, 1]} : vector<4x128xf32> to vector<4x32xf32>
    %cst_68 = arith.constant 2.000000e+00 : f32
    %276 = vector.broadcast %cst_68 : f32 to vector<4x32xf32>
    %277 = arith.mulf %276, %275 : vector<4x32xf32>
    %cst_69 = arith.constant 1.000000e+00 : f32
    %278 = vector.broadcast %cst_69 : f32 to vector<4x32xf32>
    %279 = arith.subf %277, %278 : vector<4x32xf32>
    %280 = vector.extract_strided_slice %272 {offsets = [0, 96], sizes = [4, 32], strides = [1, 1]} : vector<4x128xf32> to vector<4x32xf32>
    %281 = arith.mulf %274, %261 : vector<4x32xf32>
    %282 = arith.mulf %273, %279 : vector<4x32xf32>
    %283 = arith.addf %281, %282 : vector<4x32xf32>
    %284 = math.tanh %283 : vector<4x32xf32>
    %285 = arith.mulf %280, %284 : vector<4x32xf32>
    %286 = arith.truncf %285 : vector<4x32xf32> to vector<4x32xbf16>
    %cst_70 = arith.constant dense<0.000000e+00> : vector<4x128xf32>
    %287 = tpu.matmul %286, %190, %cst_70 {dimension_numbers = #tpu.dot_dimension_numbers<[1], [0], [0], [1], [0, 0, 1, 1], [], []>} : vector<4x32xbf16>, vector<32x128xbf16>, vector<4x128xf32> -> vector<4x128xf32>
    %288 = vector.extract_strided_slice %195 {offsets = [16, 0], sizes = [4, 128], strides = [1, 1]} : vector<32x128xf32> to vector<4x128xf32>
    %289 = arith.addf %288, %287 : vector<4x128xf32>
    %290 = arith.negf %289 : vector<4x128xf32>
    %291 = math.exp %290 : vector<4x128xf32>
    %cst_71 = arith.constant 1.000000e+00 : f32
    %292 = vector.broadcast %cst_71 : f32 to vector<4x128xf32>
    %293 = arith.addf %292, %291 : vector<4x128xf32>
    %294 = arith.divf %292, %293 : vector<4x128xf32>
    %295 = vector.extract_strided_slice %294 {offsets = [0, 0], sizes = [4, 32], strides = [1, 1]} : vector<4x128xf32> to vector<4x32xf32>
    %296 = vector.extract_strided_slice %294 {offsets = [0, 32], sizes = [4, 32], strides = [1, 1]} : vector<4x128xf32> to vector<4x32xf32>
    %297 = vector.extract_strided_slice %294 {offsets = [0, 64], sizes = [4, 32], strides = [1, 1]} : vector<4x128xf32> to vector<4x32xf32>
    %cst_72 = arith.constant 2.000000e+00 : f32
    %298 = vector.broadcast %cst_72 : f32 to vector<4x32xf32>
    %299 = arith.mulf %298, %297 : vector<4x32xf32>
    %cst_73 = arith.constant 1.000000e+00 : f32
    %300 = vector.broadcast %cst_73 : f32 to vector<4x32xf32>
    %301 = arith.subf %299, %300 : vector<4x32xf32>
    %302 = vector.extract_strided_slice %294 {offsets = [0, 96], sizes = [4, 32], strides = [1, 1]} : vector<4x128xf32> to vector<4x32xf32>
    %303 = arith.mulf %296, %283 : vector<4x32xf32>
    %304 = arith.mulf %295, %301 : vector<4x32xf32>
    %305 = arith.addf %303, %304 : vector<4x32xf32>
    %306 = math.tanh %305 : vector<4x32xf32>
    %307 = arith.mulf %302, %306 : vector<4x32xf32>
    %308 = arith.truncf %307 : vector<4x32xf32> to vector<4x32xbf16>
    %cst_74 = arith.constant dense<0.000000e+00> : vector<4x128xf32>
    %309 = tpu.matmul %308, %190, %cst_74 {dimension_numbers = #tpu.dot_dimension_numbers<[1], [0], [0], [1], [0, 0, 1, 1], [], []>} : vector<4x32xbf16>, vector<32x128xbf16>, vector<4x128xf32> -> vector<4x128xf32>
    %310 = vector.extract_strided_slice %195 {offsets = [20, 0], sizes = [4, 128], strides = [1, 1]} : vector<32x128xf32> to vector<4x128xf32>
    %311 = arith.addf %310, %309 : vector<4x128xf32>
    %312 = arith.negf %311 : vector<4x128xf32>
    %313 = math.exp %312 : vector<4x128xf32>
    %cst_75 = arith.constant 1.000000e+00 : f32
    %314 = vector.broadcast %cst_75 : f32 to vector<4x128xf32>
    %315 = arith.addf %314, %313 : vector<4x128xf32>
    %316 = arith.divf %314, %315 : vector<4x128xf32>
    %317 = vector.extract_strided_slice %316 {offsets = [0, 0], sizes = [4, 32], strides = [1, 1]} : vector<4x128xf32> to vector<4x32xf32>
    %318 = vector.extract_strided_slice %316 {offsets = [0, 32], sizes = [4, 32], strides = [1, 1]} : vector<4x128xf32> to vector<4x32xf32>
    %319 = vector.extract_strided_slice %316 {offsets = [0, 64], sizes = [4, 32], strides = [1, 1]} : vector<4x128xf32> to vector<4x32xf32>
    %cst_76 = arith.constant 2.000000e+00 : f32
    %320 = vector.broadcast %cst_76 : f32 to vector<4x32xf32>
    %321 = arith.mulf %320, %319 : vector<4x32xf32>
    %cst_77 = arith.constant 1.000000e+00 : f32
    %322 = vector.broadcast %cst_77 : f32 to vector<4x32xf32>
    %323 = arith.subf %321, %322 : vector<4x32xf32>
    %324 = vector.extract_strided_slice %316 {offsets = [0, 96], sizes = [4, 32], strides = [1, 1]} : vector<4x128xf32> to vector<4x32xf32>
    %325 = arith.mulf %318, %305 : vector<4x32xf32>
    %326 = arith.mulf %317, %323 : vector<4x32xf32>
    %327 = arith.addf %325, %326 : vector<4x32xf32>
    %328 = math.tanh %327 : vector<4x32xf32>
    %329 = arith.mulf %324, %328 : vector<4x32xf32>
    %330 = arith.truncf %329 : vector<4x32xf32> to vector<4x32xbf16>
    %cst_78 = arith.constant dense<0.000000e+00> : vector<4x128xf32>
    %331 = tpu.matmul %330, %190, %cst_78 {dimension_numbers = #tpu.dot_dimension_numbers<[1], [0], [0], [1], [0, 0, 1, 1], [], []>} : vector<4x32xbf16>, vector<32x128xbf16>, vector<4x128xf32> -> vector<4x128xf32>
    %332 = vector.extract_strided_slice %195 {offsets = [24, 0], sizes = [4, 128], strides = [1, 1]} : vector<32x128xf32> to vector<4x128xf32>
    %333 = arith.addf %332, %331 : vector<4x128xf32>
    %334 = arith.negf %333 : vector<4x128xf32>
    %335 = math.exp %334 : vector<4x128xf32>
    %cst_79 = arith.constant 1.000000e+00 : f32
    %336 = vector.broadcast %cst_79 : f32 to vector<4x128xf32>
    %337 = arith.addf %336, %335 : vector<4x128xf32>
    %338 = arith.divf %336, %337 : vector<4x128xf32>
    %339 = vector.extract_strided_slice %338 {offsets = [0, 0], sizes = [4, 32], strides = [1, 1]} : vector<4x128xf32> to vector<4x32xf32>
    %340 = vector.extract_strided_slice %338 {offsets = [0, 32], sizes = [4, 32], strides = [1, 1]} : vector<4x128xf32> to vector<4x32xf32>
    %341 = vector.extract_strided_slice %338 {offsets = [0, 64], sizes = [4, 32], strides = [1, 1]} : vector<4x128xf32> to vector<4x32xf32>
    %cst_80 = arith.constant 2.000000e+00 : f32
    %342 = vector.broadcast %cst_80 : f32 to vector<4x32xf32>
    %343 = arith.mulf %342, %341 : vector<4x32xf32>
    %cst_81 = arith.constant 1.000000e+00 : f32
    %344 = vector.broadcast %cst_81 : f32 to vector<4x32xf32>
    %345 = arith.subf %343, %344 : vector<4x32xf32>
    %346 = vector.extract_strided_slice %338 {offsets = [0, 96], sizes = [4, 32], strides = [1, 1]} : vector<4x128xf32> to vector<4x32xf32>
    %347 = arith.mulf %340, %327 : vector<4x32xf32>
    %348 = arith.mulf %339, %345 : vector<4x32xf32>
    %349 = arith.addf %347, %348 : vector<4x32xf32>
    %350 = math.tanh %349 : vector<4x32xf32>
    %351 = arith.mulf %346, %350 : vector<4x32xf32>
    %352 = arith.truncf %351 : vector<4x32xf32> to vector<4x32xbf16>
    %cst_82 = arith.constant dense<0.000000e+00> : vector<4x128xf32>
    %353 = tpu.matmul %352, %190, %cst_82 {dimension_numbers = #tpu.dot_dimension_numbers<[1], [0], [0], [1], [0, 0, 1, 1], [], []>} : vector<4x32xbf16>, vector<32x128xbf16>, vector<4x128xf32> -> vector<4x128xf32>
    %354 = vector.extract_strided_slice %195 {offsets = [28, 0], sizes = [4, 128], strides = [1, 1]} : vector<32x128xf32> to vector<4x128xf32>
    %355 = arith.addf %354, %353 : vector<4x128xf32>
    %356 = arith.negf %355 : vector<4x128xf32>
    %357 = math.exp %356 : vector<4x128xf32>
    %cst_83 = arith.constant 1.000000e+00 : f32
    %358 = vector.broadcast %cst_83 : f32 to vector<4x128xf32>
    %359 = arith.addf %358, %357 : vector<4x128xf32>
    %360 = arith.divf %358, %359 : vector<4x128xf32>
    %361 = vector.extract_strided_slice %360 {offsets = [0, 0], sizes = [4, 32], strides = [1, 1]} : vector<4x128xf32> to vector<4x32xf32>
    %362 = vector.extract_strided_slice %360 {offsets = [0, 32], sizes = [4, 32], strides = [1, 1]} : vector<4x128xf32> to vector<4x32xf32>
    %363 = vector.extract_strided_slice %360 {offsets = [0, 64], sizes = [4, 32], strides = [1, 1]} : vector<4x128xf32> to vector<4x32xf32>
    %cst_84 = arith.constant 2.000000e+00 : f32
    %364 = vector.broadcast %cst_84 : f32 to vector<4x32xf32>
    %365 = arith.mulf %364, %363 : vector<4x32xf32>
    %cst_85 = arith.constant 1.000000e+00 : f32
    %366 = vector.broadcast %cst_85 : f32 to vector<4x32xf32>
    %367 = arith.subf %365, %366 : vector<4x32xf32>
    %368 = vector.extract_strided_slice %360 {offsets = [0, 96], sizes = [4, 32], strides = [1, 1]} : vector<4x128xf32> to vector<4x32xf32>
    %369 = arith.mulf %362, %349 : vector<4x32xf32>
    %370 = arith.mulf %361, %367 : vector<4x32xf32>
    %371 = arith.addf %369, %370 : vector<4x32xf32>
    %372 = math.tanh %371 : vector<4x32xf32>
    %373 = arith.mulf %368, %372 : vector<4x32xf32>
    %374 = tpu.concatenate %219, %241, %263, %285, %307, %329, %351, %373 in 0 : vector<4x32xf32>, vector<4x32xf32>, vector<4x32xf32>, vector<4x32xf32>, vector<4x32xf32>, vector<4x32xf32>, vector<4x32xf32>, vector<4x32xf32> -> vector<32x32xf32>
    %375 = arith.truncf %374 : vector<32x32xf32> to vector<32x32xbf16>
    %cst_86 = arith.constant dense<0.000000e+00> : vector<32x128xf32>
    %376 = tpu.matmul %375, %0, %cst_86 {dimension_numbers = #tpu.dot_dimension_numbers<[1], [0], [0], [1], [0, 0, 1, 1], [], []>} : vector<32x32xbf16>, vector<32x128xbf16>, vector<32x128xf32> -> vector<32x128xf32>
    %377 = vector.broadcast %1 : vector<1x128xf32> to vector<32x128xf32>
    %378 = arith.addf %376, %377 : vector<32x128xf32>
    %c0_87 = arith.constant 0 : index
    %c0_88 = arith.constant 0 : index
    %379 = vector.load %arg9[%c0_87, %c0_88] : memref<32x128xf32, #tpu.memory_space<vmem>>, vector<32x128xf32>
    tpu.vector_store %arg9[%c0_87, %c0_88], %378 {strides = array<i32>} : memref<32x128xf32, #tpu.memory_space<vmem>>, vector<32x128xf32>,
    return
  }
}

</mosaic_0001>

<llo_original>
// kernel: custom-call.2
$region0: #{custom-call.2}
  %s0 = inlined_call_operand.hbm [shape: f32[22,50], index: 0, kind: output, shape index: {}]

// kernel: decoder_forward.1
$region0: #{decoder_forward.1}
  #allocation0 [shape = 'u32[]', space=smem, size = 0x4, offset = 0x4, fixed_abs, tag = 'smem constant byte address 0x4 - core index']
  #allocation1 [shape = 'u32[144,128]{1,0:T(1,128)}', space=vmem, size = 0x12000, scoped, tag = 'internal scratch']
  %s0 = inlined_call_operand.vmem [shape: f32[32,32], index: 0, kind: input, shape index: {}]
  %s1 = inlined_call_operand.vmem [shape: bf16[32,128], index: 1, kind: input, shape index: {}]
  %s2 = inlined_call_operand.vmem [shape: bf16[32,128], index: 2, kind: input, shape index: {}]
  %s3 = inlined_call_operand.vmem [shape: f32[1,128], index: 3, kind: input, shape index: {}]
  %s4 = inlined_call_operand.vmem [shape: bf16[32,128], index: 4, kind: input, shape index: {}]
  %s5 = inlined_call_operand.vmem [shape: bf16[32,128], index: 5, kind: input, shape index: {}]
  %s6 = inlined_call_operand.vmem [shape: f32[1,128], index: 6, kind: input, shape index: {}]
  %s7 = inlined_call_operand.vmem [shape: bf16[32,128], index: 7, kind: input, shape index: {}]
  %s8 = inlined_call_operand.vmem [shape: f32[1,128], index: 8, kind: input, shape index: {}]
  %s9 = inlined_call_operand.vmem [shape: f32[32,128], index: 9, kind: output, shape index: {}]
  %s10 = sld [smem:[#allocation0]]
  $region46: #{decoder_forward.1} parent=0
    _
  %s12 = ssub.s32 1, %s10
  %s13 = scalar_select 0, %s12, %s10
  // Predicated region
  $region2: #{decoder_forward.1} parent=0 // pred_check
    _
  $region3: #{decoder_forward.1} parent=0 // pred_check_branch
    %15 = sbr.rel (0) target = $region5
  $region4: #{decoder_forward.1} parent=0 // pred_region
    _
  $region5: #{decoder_forward.1} parent=0 // pred_fallthru
    _
  // Predicated region
  $region6: #{decoder_forward.1} parent=0 // pred_check
    _
  $region7: #{decoder_forward.1} parent=0 // pred_check_branch
    %17 = sbr.rel (0) target = $region9
  $region8: #{decoder_forward.1} parent=0 // pred_region
    _
  $region9: #{decoder_forward.1} parent=0 // pred_fallthru
    _
  // Predicated region
  $region10: #{decoder_forward.1} parent=0 // pred_check
    _
  $region11: #{decoder_forward.1} parent=0 // pred_check_branch
    %19 = sbr.rel (0) target = $region13
  $region12: #{decoder_forward.1} parent=0 // pred_region
    _
  $region13: #{decoder_forward.1} parent=0 // pred_fallthru
    _
  // Predicated region
  $region14: #{decoder_forward.1} parent=0 // pred_check
    _
  $region15: #{decoder_forward.1} parent=0 // pred_check_branch
    %21 = sbr.rel (0) target = $region17
  $region16: #{decoder_forward.1} parent=0 // pred_region
    _
  $region17: #{decoder_forward.1} parent=0 // pred_fallthru
    _
  // Predicated region
  $region18: #{decoder_forward.1} parent=0 // pred_check
    _
  $region19: #{decoder_forward.1} parent=0 // pred_check_branch
    %23 = sbr.rel (0) target = $region21
  $region20: #{decoder_forward.1} parent=0 // pred_region
    _
  $region21: #{decoder_forward.1} parent=0 // pred_fallthru
    _
  // Predicated region
  $region22: #{decoder_forward.1} parent=0 // pred_check
    _
  $region23: #{decoder_forward.1} parent=0 // pred_check_branch
    %25 = sbr.rel (0) target = $region25
  $region24: #{decoder_forward.1} parent=0 // pred_region
    _
  $region25: #{decoder_forward.1} parent=0 // pred_fallthru
    _
  // Predicated region
  $region26: #{decoder_forward.1} parent=0 // pred_check
    _
  $region27: #{decoder_forward.1} parent=0 // pred_check_branch
    %27 = sbr.rel (0) target = $region29
  $region28: #{decoder_forward.1} parent=0 // pred_region
    _
  $region29: #{decoder_forward.1} parent=0 // pred_fallthru
    _
  // Predicated region
  $region30: #{decoder_forward.1} parent=0 // pred_check
    _
  $region31: #{decoder_forward.1} parent=0 // pred_check_branch
    %29 = sbr.rel (0) target = $region33
  $region32: #{decoder_forward.1} parent=0 // pred_region
    _
  $region33: #{decoder_forward.1} parent=0 // pred_fallthru
    _
  // Predicated region
  $region34: #{decoder_forward.1} parent=0 // pred_check
    _
  $region35: #{decoder_forward.1} parent=0 // pred_check_branch
    %31 = sbr.rel (0) target = $region37
  $region36: #{decoder_forward.1} parent=0 // pred_region
    _
  $region37: #{decoder_forward.1} parent=0 // pred_fallthru
    _
  %v33 = vld [vmem:[%s7] sm:$0xf]
  %v34 = vld [vmem:[%s7 + $0x4] sm:$0xf]
  %v35 = vld [vmem:[%s7 + $0x8] sm:$0xf]
  %v36 = vld [vmem:[%s7 + $0xc] sm:$0xf]
  %v37 = vld [vmem:[%s8] sm:$0x1]
  %v38 = vld [vmem:[%s0] sm:$0xff]
  %v39 = vld [vmem:[%s0 + $0x8] sm:$0xff]
  %v40 = vld [vmem:[%s0 + $0x10] sm:$0xff]
  %v41 = vld [vmem:[%s0 + $0x18] sm:$0xff]
  %v42 = vld [vmem:[%s1] sm:$0xf]
  %v43 = vld [vmem:[%s1 + $0x4] sm:$0xf]
  %v44 = vld [vmem:[%s1 + $0x8] sm:$0xf]
  %v45 = vld [vmem:[%s1 + $0xc] sm:$0xf]
  %v46 = vld [vmem:[%s2] sm:$0xf]
  %v47 = vld [vmem:[%s2 + $0x4] sm:$0xf]
  %v48 = vld [vmem:[%s2 + $0x8] sm:$0xf]
  %v49 = vld [vmem:[%s2 + $0xc] sm:$0xf]
  %v50 = vld [vmem:[%s3] sm:$0x1]
  %v51 = vpack.c.bf16 %v39, %v38
  %v52 = vpack.c.bf16 %v41, %v40
  %v54 = vlaneseq
  %v55 = vshrl.u32 %v54, 7
  %v56 = vsub.s32 0, %v55
  %v57 = vrot.slane %v50, %v56
  %v63 = vunpack.c.l.b16 %v42
  %v64 = vunpack.c.l.b16 %v43
  %v65 = vunpack.c.l.b16 %v44
  %v66 = vunpack.c.l.b16 %v45
  %v67 = vpack.c.b16 %v64, %v63
  %v68 = vpack.c.b16 %v66, %v65
  %vm71 = vcmask 261120
  %v73 = vsel %vm71, %v51, 0
  %v76 = vsel %vm71, %v52, 0
  %78 = vmatprep.subr.bf16.mxu0 0
  %79 = vmatpush1.bf16.msra.mxu0 %v67
  %80 = vmatprep.subr.bf16.mxu0 0
  %81 = vmatpush1.bf16.msra.mxu0 %v68
  %82 = vmatprep.subr.bf16.mxu0 0
  %83 = vmatpush1.bf16.msra.mxu0 0
  %84 = vmatprep.subr.bf16.mxu0 0
  %85 = vmatpush1.bf16.msra.mxu0 0
  %86 = vmatprep.subr.bf16.mxu0 0
  %87 = vmatpush1.bf16.msra.mxu0 0
  %88 = vmatprep.subr.bf16.mxu0 0
  %89 = vmatpush1.bf16.msra.mxu0 0
  %90 = vmatprep.subr.bf16.mxu0 0
  %91 = vmatpush1.bf16.msra.mxu0 0
  %92 = vmatprep.subr.bf16.mxu0 0
  %93 = vmatpush1.bf16.msra.mxu0 0
  %94 = vmatprep.subr.bf16.mxu0 0
  %95 = vmatpush1.bf16.msra.mxu0 0
  %96 = vmatprep.subr.bf16.mxu0 0
  %97 = vmatpush1.bf16.msra.mxu0 0
  %98 = vmatprep.subr.bf16.mxu0 0
  %99 = vmatpush1.bf16.msra.mxu0 0
  %100 = vmatprep.subr.bf16.mxu0 0
  %101 = vmatpush1.bf16.msra.mxu0 0
  %102 = vmatprep.subr.bf16.mxu0 0
  %103 = vmatpush1.bf16.msra.mxu0 0
  %104 = vmatprep.subr.bf16.mxu0 0
  %105 = vmatpush1.bf16.msra.mxu0 0
  %106 = vmatprep.subr.bf16.mxu0 0
  %107 = vmatpush1.bf16.msra.mxu0 0
  %108 = vmatprep.subr.bf16.mxu0 0
  %109 = vmatpush1.bf16.msra.mxu0 0
  %110 = vmatprep.mubr.bf16.mxu0 0
  %111 = vmatmul.mubr.bf16.gmra.mrb[0].mxu0 %v73
  %v112 = vpop.f32.mrb[0].mxu0
  %v113 = vadd.f32 %v57, %v112
  %v114 = vpop.f32.mrb[0].mxu0
  %v115 = vpop.f32.mrb[0].mxu0
  %v116 = vadd.f32 %v57, %v115
  %v117 = vpop.f32.mrb[0].mxu0
  %118 = vmatprep.mubr.bf16.mxu0 0
  %119 = vmatmul.mubr.bf16.gmra.mrb[0].mxu0 %v76
  %v120 = vpop.f32.mrb[0].mxu0
  %v121 = vadd.f32 %v57, %v120
  %v122 = vpop.f32.mrb[0].mxu0
  %v123 = vpop.f32.mrb[0].mxu0
  %v124 = vadd.f32 %v57, %v123
  %v125 = vpop.f32.mrb[0].mxu0
  %126 = vdwg.mxu0
  %v131 = vunpack.c.l.b16 %v46
  %v132 = vunpack.c.l.b16 %v47
  %v133 = vunpack.c.l.b16 %v48
  %v134 = vunpack.c.l.b16 %v49
  %v135 = vpack.c.b16 %v132, %v131
  %v136 = vpack.c.b16 %v134, %v133
  %v140 = vsel %vm71, 0, 0
  %142 = vmatprep.subr.bf16.mxu0 0
  %143 = vmatpush1.bf16.msra.mxu0 %v135
  %144 = vmatprep.subr.bf16.mxu0 0
  %145 = vmatpush1.bf16.msra.mxu0 %v136
  %146 = vmatprep.subr.bf16.mxu0 0
  %147 = vmatpush1.bf16.msra.mxu0 0
  %148 = vmatprep.subr.bf16.mxu0 0
  %149 = vmatpush1.bf16.msra.mxu0 0
  %150 = vmatprep.subr.bf16.mxu0 0
  %151 = vmatpush1.bf16.msra.mxu0 0
  %152 = vmatprep.subr.bf16.mxu0 0
  %153 = vmatpush1.bf16.msra.mxu0 0
  %154 = vmatprep.subr.bf16.mxu0 0
  %155 = vmatpush1.bf16.msra.mxu0 0
  %156 = vmatprep.subr.bf16.mxu0 0
  %157 = vmatpush1.bf16.msra.mxu0 0
  %158 = vmatprep.subr.bf16.mxu0 0
  %159 = vmatpush1.bf16.msra.mxu0 0
  %160 = vmatprep.subr.bf16.mxu0 0
  %161 = vmatpush1.bf16.msra.mxu0 0
  %162 = vmatprep.subr.bf16.mxu0 0
  %163 = vmatpush1.bf16.msra.mxu0 0
  %164 = vmatprep.subr.bf16.mxu0 0
  %165 = vmatpush1.bf16.msra.mxu0 0
  %166 = vmatprep.subr.bf16.mxu0 0
  %167 = vmatpush1.bf16.msra.mxu0 0
  %168 = vmatprep.subr.bf16.mxu0 0
  %169 = vmatpush1.bf16.msra.mxu0 0
  %170 = vmatprep.subr.bf16.mxu0 0
  %171 = vmatpush1.bf16.msra.mxu0 0
  %172 = vmatprep.subr.bf16.mxu0 0
  %173 = vmatpush1.bf16.msra.mxu0 0
  %174 = vmatprep.mubr.bf16.mxu0 0
  %175 = vmatmul.mubr.bf16.gmra.mrb[0].mxu0 %v140
  %v176 = vpop.f32.mrb[0].mxu0
  %v177 = vadd.f32 0.0, %v176
  %v178 = vpop.f32.mrb[0].mxu0
  %v179 = vpop.f32.mrb[0].mxu0
  %v180 = vpop.f32.mrb[0].mxu0
  %181 = vdwg.mxu0
  %v182 = vadd.f32 %v113, %v177
  %v183 = vxor.u32 %v182, 2147483648
  %v184 = vmul.f32 %v183, 1.442695
  %v185 = vpow.pop %v184
  %v186 = vadd.f32 %v185, 1.0
  %v187 = vrcp.pop %v186
  %v188 = vmul.f32 1.0, %v187
  %v189 = vmul.f32 %v188, 2.0
  %v190 = vsub.f32 %v189, 1.0
  %v191 = vmul.f32 %v188, 0.0
  %193 = vrot.lane.b32.xlu0 %v190, 64
  %v194 = vpop.permute.xlu0 %193
  %v196 = vmul.f32 %v188, %v194
  %198 = vrot.lane.b32.xlu0 %v196, 32
  %v199 = vpop.permute.xlu0 %198
  %v201 = vadd.f32 %v191, %v199
  %v202 = vtanh.pop %v201
  %204 = vrot.lane.b32.xlu0 %v202, 64
  %v205 = vpop.permute.xlu0 %204
  %v207 = vmul.f32 %v188, %v205
  %v208 = vpack.c.bf16 %v207, %v207
  %210 = vrot.lane.b32.xlu0 %v208, 32
  %v211 = vpop.permute.xlu0 %210
  %v213 = vsel %vm71, %v211, 0
  %215 = vmatprep.subr.bf16.mxu0 0
  %216 = vmatpush1.bf16.msra.mxu0 %v135
  %217 = vmatprep.subr.bf16.mxu0 0
  %218 = vmatpush1.bf16.msra.mxu0 %v136
  %219 = vmatprep.subr.bf16.mxu0 0
  %220 = vmatpush1.bf16.msra.mxu0 0
  %221 = vmatprep.subr.bf16.mxu0 0
  %222 = vmatpush1.bf16.msra.mxu0 0
  %223 = vmatprep.subr.bf16.mxu0 0
  %224 = vmatpush1.bf16.msra.mxu0 0
  %225 = vmatprep.subr.bf16.mxu0 0
  %226 = vmatpush1.bf16.msra.mxu0 0
  %227 = vmatprep.subr.bf16.mxu0 0
  %228 = vmatpush1.bf16.msra.mxu0 0
  %229 = vmatprep.subr.bf16.mxu0 0
  %230 = vmatpush1.bf16.msra.mxu0 0
  %231 = vmatprep.subr.bf16.mxu0 0
  %232 = vmatpush1.bf16.msra.mxu0 0
  %233 = vmatprep.subr.bf16.mxu0 0
  %234 = vmatpush1.bf16.msra.mxu0 0
  %235 = vmatprep.subr.bf16.mxu0 0
  %236 = vmatpush1.bf16.msra.mxu0 0
  %237 = vmatprep.subr.bf16.mxu0 0
  %238 = vmatpush1.bf16.msra.mxu0 0
  %239 = vmatprep.subr.bf16.mxu0 0
  %240 = vmatpush1.bf16.msra.mxu0 0
  %241 = vmatprep.subr.bf16.mxu0 0
  %242 = vmatpush1.bf16.msra.mxu0 0
  %243 = vmatprep.subr.bf16.mxu0 0
  %244 = vmatpush1.bf16.msra.mxu0 0
  %245 = vmatprep.subr.bf16.mxu0 0
  %246 = vmatpush1.bf16.msra.mxu0 0
  %247 = vmatprep.mubr.bf16.mxu0 0
  %248 = vmatmul.mubr.bf16.gmra.mrb[0].mxu0 %v213
  %v249 = vpop.f32.mrb[0].mxu0
  %v250 = vadd.f32 0.0, %v249
  %v251 = vpop.f32.mrb[0].mxu0
  %v252 = vpop.f32.mrb[0].mxu0
  %v253 = vpop.f32.mrb[0].mxu0
  %254 = vdwg.mxu0
  %v256 = vrot.slane %v250, 4
  %v258 = vadd.f32 %v113, %v256
  %v259 = vxor.u32 %v258, 2147483648
  %v260 = vmul.f32 %v259, 1.442695
  %v261 = vpow.pop %v260
  %v262 = vadd.f32 %v261, 1.0
  %v263 = vrcp.pop %v262
  %v264 = vmul.f32 1.0, %v263
  %v265 = vmul.f32 %v264, 2.0
  %v266 = vsub.f32 %v265, 1.0
  %v268 = vrot.slane %v201, 4
  %v270 = vmul.f32 %v264, %v268
  %272 = vrot.lane.b32.xlu0 %v266, 64
  %v273 = vpop.permute.xlu0 %272
  %v275 = vmul.f32 %v264, %v273
  %277 = vrot.lane.b32.xlu0 %v275, 32
  %v278 = vpop.permute.xlu0 %277
  %v280 = vadd.f32 %v270, %v278
  %v281 = vtanh.pop %v280
  %283 = vrot.lane.b32.xlu0 %v281, 64
  %v284 = vpop.permute.xlu0 %283
  %v286 = vmul.f32 %v264, %v284
  %v287 = vpack.c.bf16 %v286, %v286
  %v289 = vrot.slane %v287, 2
  %290 = vrot.lane.b32.xlu0 %v289, 32
  %v291 = vpop.permute.xlu0 %290
  %v293 = vsel %vm71, %v291, 0
  %295 = vmatprep.subr.bf16.mxu0 0
  %296 = vmatpush1.bf16.msra.mxu0 %v135
  %297 = vmatprep.subr.bf16.mxu0 0
  %298 = vmatpush1.bf16.msra.mxu0 %v136
  %299 = vmatprep.subr.bf16.mxu0 0
  %300 = vmatpush1.bf16.msra.mxu0 0
  %301 = vmatprep.subr.bf16.mxu0 0
  %302 = vmatpush1.bf16.msra.mxu0 0
  %303 = vmatprep.subr.bf16.mxu0 0
  %304 = vmatpush1.bf16.msra.mxu0 0
  %305 = vmatprep.subr.bf16.mxu0 0
  %306 = vmatpush1.bf16.msra.mxu0 0
  %307 = vmatprep.subr.bf16.mxu0 0
  %308 = vmatpush1.bf16.msra.mxu0 0
  %309 = vmatprep.subr.bf16.mxu0 0
  %310 = vmatpush1.bf16.msra.mxu0 0
  %311 = vmatprep.subr.bf16.mxu0 0
  %312 = vmatpush1.bf16.msra.mxu0 0
  %313 = vmatprep.subr.bf16.mxu0 0
  %314 = vmatpush1.bf16.msra.mxu0 0
  %315 = vmatprep.subr.bf16.mxu0 0
  %316 = vmatpush1.bf16.msra.mxu0 0
  %317 = vmatprep.subr.bf16.mxu0 0
  %318 = vmatpush1.bf16.msra.mxu0 0
  %319 = vmatprep.subr.bf16.mxu0 0
  %320 = vmatpush1.bf16.msra.mxu0 0
  %321 = vmatprep.subr.bf16.mxu0 0
  %322 = vmatpush1.bf16.msra.mxu0 0
  %323 = vmatprep.subr.bf16.mxu0 0
  %324 = vmatpush1.bf16.msra.mxu0 0
  %325 = vmatprep.subr.bf16.mxu0 0
  %326 = vmatpush1.bf16.msra.mxu0 0
  %327 = vmatprep.mubr.bf16.mxu0 0
  %328 = vmatmul.mubr.bf16.gmra.mrb[0].mxu0 %v293
  %v329 = vpop.f32.mrb[0].mxu0
  %v330 = vadd.f32 0.0, %v329
  %v331 = vpop.f32.mrb[0].mxu0
  %v332 = vpop.f32.mrb[0].mxu0
  %v333 = vpop.f32.mrb[0].mxu0
  %334 = vdwg.mxu0
  %v335 = vadd.f32 %v116, %v330
  %v336 = vxor.u32 %v335, 2147483648
  %v337 = vmul.f32 %v336, 1.442695
  %v338 = vpow.pop %v337
  %v339 = vadd.f32 %v338, 1.0
  %v340 = vrcp.pop %v339
  %v341 = vmul.f32 1.0, %v340
  %v342 = vmul.f32 %v341, 2.0
  %v343 = vsub.f32 %v342, 1.0
  %v345 = vrot.slane %v280, 4
  %v347 = vmul.f32 %v341, %v345
  %349 = vrot.lane.b32.xlu0 %v343, 64
  %v350 = vpop.permute.xlu0 %349
  %v352 = vmul.f32 %v341, %v350
  %354 = vrot.lane.b32.xlu0 %v352, 32
  %v355 = vpop.permute.xlu0 %354
  %v357 = vadd.f32 %v347, %v355
  %v358 = vtanh.pop %v357
  %360 = vrot.lane.b32.xlu0 %v358, 64
  %v361 = vpop.permute.xlu0 %360
  %v363 = vmul.f32 %v341, %v361
  %v364 = vpack.c.bf16 %v363, %v363
  %366 = vrot.lane.b32.xlu0 %v364, 32
  %v367 = vpop.permute.xlu0 %366
  %v369 = vsel %vm71, %v367, 0
  %371 = vmatprep.subr.bf16.mxu0 0
  %372 = vmatpush1.bf16.msra.mxu0 %v135
  %373 = vmatprep.subr.bf16.mxu0 0
  %374 = vmatpush1.bf16.msra.mxu0 %v136
  %375 = vmatprep.subr.bf16.mxu0 0
  %376 = vmatpush1.bf16.msra.mxu0 0
  %377 = vmatprep.subr.bf16.mxu0 0
  %378 = vmatpush1.bf16.msra.mxu0 0
  %379 = vmatprep.subr.bf16.mxu0 0
  %380 = vmatpush1.bf16.msra.mxu0 0
  %381 = vmatprep.subr.bf16.mxu0 0
  %382 = vmatpush1.bf16.msra.mxu0 0
  %383 = vmatprep.subr.bf16.mxu0 0
  %384 = vmatpush1.bf16.msra.mxu0 0
  %385 = vmatprep.subr.bf16.mxu0 0
  %386 = vmatpush1.bf16.msra.mxu0 0
  %387 = vmatprep.subr.bf16.mxu0 0
  %388 = vmatpush1.bf16.msra.mxu0 0
  %389 = vmatprep.subr.bf16.mxu0 0
  %390 = vmatpush1.bf16.msra.mxu0 0
  %391 = vmatprep.subr.bf16.mxu0 0
  %392 = vmatpush1.bf16.msra.mxu0 0
  %393 = vmatprep.subr.bf16.mxu0 0
  %394 = vmatpush1.bf16.msra.mxu0 0
  %395 = vmatprep.subr.bf16.mxu0 0
  %396 = vmatpush1.bf16.msra.mxu0 0
  %397 = vmatprep.subr.bf16.mxu0 0
  %398 = vmatpush1.bf16.msra.mxu0 0
  %399 = vmatprep.subr.bf16.mxu0 0
  %400 = vmatpush1.bf16.msra.mxu0 0
  %401 = vmatprep.subr.bf16.mxu0 0
  %402 = vmatpush1.bf16.msra.mxu0 0
  %403 = vmatprep.mubr.bf16.mxu0 0
  %404 = vmatmul.mubr.bf16.gmra.mrb[0].mxu0 %v369
  %v405 = vpop.f32.mrb[0].mxu0
  %v406 = vadd.f32 0.0, %v405
  %v407 = vpop.f32.mrb[0].mxu0
  %v408 = vpop.f32.mrb[0].mxu0
  %v409 = vpop.f32.mrb[0].mxu0
  %410 = vdwg.mxu0
  %v412 = vrot.slane %v406, 4
  %v414 = vadd.f32 %v116, %v412
  %v415 = vxor.u32 %v414, 2147483648
  %v416 = vmul.f32 %v415, 1.442695
  %v417 = vpow.pop %v416
  %v418 = vadd.f32 %v417, 1.0
  %v419 = vrcp.pop %v418
  %v420 = vmul.f32 1.0, %v419
  %v421 = vmul.f32 %v420, 2.0
  %v422 = vsub.f32 %v421, 1.0
  %v424 = vrot.slane %v357, 4
  %v426 = vmul.f32 %v420, %v424
  %428 = vrot.lane.b32.xlu0 %v422, 64
  %v429 = vpop.permute.xlu0 %428
  %v431 = vmul.f32 %v420, %v429
  %433 = vrot.lane.b32.xlu0 %v431, 32
  %v434 = vpop.permute.xlu0 %433
  %v436 = vadd.f32 %v426, %v434
  %v437 = vtanh.pop %v436
  %439 = vrot.lane.b32.xlu0 %v437, 64
  %v440 = vpop.permute.xlu0 %439
  %v442 = vmul.f32 %v420, %v440
  %v443 = vpack.c.bf16 %v442, %v442
  %v445 = vrot.slane %v443, 2
  %446 = vrot.lane.b32.xlu0 %v445, 32
  %v447 = vpop.permute.xlu0 %446
  %v449 = vsel %vm71, %v447, 0
  %451 = vmatprep.subr.bf16.mxu0 0
  %452 = vmatpush1.bf16.msra.mxu0 %v135
  %453 = vmatprep.subr.bf16.mxu0 0
  %454 = vmatpush1.bf16.msra.mxu0 %v136
  %455 = vmatprep.subr.bf16.mxu0 0
  %456 = vmatpush1.bf16.msra.mxu0 0
  %457 = vmatprep.subr.bf16.mxu0 0
  %458 = vmatpush1.bf16.msra.mxu0 0
  %459 = vmatprep.subr.bf16.mxu0 0
  %460 = vmatpush1.bf16.msra.mxu0 0
  %461 = vmatprep.subr.bf16.mxu0 0
  %462 = vmatpush1.bf16.msra.mxu0 0
  %463 = vmatprep.subr.bf16.mxu0 0
  %464 = vmatpush1.bf16.msra.mxu0 0
  %465 = vmatprep.subr.bf16.mxu0 0
  %466 = vmatpush1.bf16.msra.mxu0 0
  %467 = vmatprep.subr.bf16.mxu0 0
  %468 = vmatpush1.bf16.msra.mxu0 0
  %469 = vmatprep.subr.bf16.mxu0 0
  %470 = vmatpush1.bf16.msra.mxu0 0
  %471 = vmatprep.subr.bf16.mxu0 0
  %472 = vmatpush1.bf16.msra.mxu0 0
  %473 = vmatprep.subr.bf16.mxu0 0
  %474 = vmatpush1.bf16.msra.mxu0 0
  %475 = vmatprep.subr.bf16.mxu0 0
  %476 = vmatpush1.bf16.msra.mxu0 0
  %477 = vmatprep.subr.bf16.mxu0 0
  %478 = vmatpush1.bf16.msra.mxu0 0
  %479 = vmatprep.subr.bf16.mxu0 0
  %480 = vmatpush1.bf16.msra.mxu0 0
  %481 = vmatprep.subr.bf16.mxu0 0
  %482 = vmatpush1.bf16.msra.mxu0 0
  %483 = vmatprep.mubr.bf16.mxu0 0
  %484 = vmatmul.mubr.bf16.gmra.mrb[0].mxu0 %v449
  %v485 = vpop.f32.mrb[0].mxu0
  %v486 = vadd.f32 0.0, %v485
  %v487 = vpop.f32.mrb[0].mxu0
  %v488 = vpop.f32.mrb[0].mxu0
  %v489 = vpop.f32.mrb[0].mxu0
  %490 = vdwg.mxu0
  %v491 = vadd.f32 %v121, %v486
  %v492 = vxor.u32 %v491, 2147483648
  %v493 = vmul.f32 %v492, 1.442695
  %v494 = vpow.pop %v493
  %v495 = vadd.f32 %v494, 1.0
  %v496 = vrcp.pop %v495
  %v497 = vmul.f32 1.0, %v496
  %v498 = vmul.f32 %v497, 2.0
  %v499 = vsub.f32 %v498, 1.0
  %v501 = vrot.slane %v436, 4
  %v503 = vmul.f32 %v497, %v501
  %505 = vrot.lane.b32.xlu0 %v499, 64
  %v506 = vpop.permute.xlu0 %505
  %v508 = vmul.f32 %v497, %v506
  %510 = vrot.lane.b32.xlu0 %v508, 32
  %v511 = vpop.permute.xlu0 %510
  %v513 = vadd.f32 %v503, %v511
  %v514 = vtanh.pop %v513
  %516 = vrot.lane.b32.xlu0 %v514, 64
  %v517 = vpop.permute.xlu0 %516
  %v519 = vmul.f32 %v497, %v517
  %v520 = vpack.c.bf16 %v519, %v519
  %522 = vrot.lane.b32.xlu0 %v520, 32
  %v523 = vpop.permute.xlu0 %522
  %v525 = vsel %vm71, %v523, 0
  %527 = vmatprep.subr.bf16.mxu0 0
  %528 = vmatpush1.bf16.msra.mxu0 %v135
  %529 = vmatprep.subr.bf16.mxu0 0
  %530 = vmatpush1.bf16.msra.mxu0 %v136
  %531 = vmatprep.subr.bf16.mxu0 0
  %532 = vmatpush1.bf16.msra.mxu0 0
  %533 = vmatprep.subr.bf16.mxu0 0
  %534 = vmatpush1.bf16.msra.mxu0 0
  %535 = vmatprep.subr.bf16.mxu0 0
  %536 = vmatpush1.bf16.msra.mxu0 0
  %537 = vmatprep.subr.bf16.mxu0 0
  %538 = vmatpush1.bf16.msra.mxu0 0
  %539 = vmatprep.subr.bf16.mxu0 0
  %540 = vmatpush1.bf16.msra.mxu0 0
  %541 = vmatprep.subr.bf16.mxu0 0
  %542 = vmatpush1.bf16.msra.mxu0 0
  %543 = vmatprep.subr.bf16.mxu0 0
  %544 = vmatpush1.bf16.msra.mxu0 0
  %545 = vmatprep.subr.bf16.mxu0 0
  %546 = vmatpush1.bf16.msra.mxu0 0
  %547 = vmatprep.subr.bf16.mxu0 0
  %548 = vmatpush1.bf16.msra.mxu0 0
  %549 = vmatprep.subr.bf16.mxu0 0
  %550 = vmatpush1.bf16.msra.mxu0 0
  %551 = vmatprep.subr.bf16.mxu0 0
  %552 = vmatpush1.bf16.msra.mxu0 0
  %553 = vmatprep.subr.bf16.mxu0 0
  %554 = vmatpush1.bf16.msra.mxu0 0
  %555 = vmatprep.subr.bf16.mxu0 0
  %556 = vmatpush1.bf16.msra.mxu0 0
  %557 = vmatprep.subr.bf16.mxu0 0
  %558 = vmatpush1.bf16.msra.mxu0 0
  %559 = vmatprep.mubr.bf16.mxu0 0
  %560 = vmatmul.mubr.bf16.gmra.mrb[0].mxu0 %v525
  %v561 = vpop.f32.mrb[0].mxu0
  %v562 = vadd.f32 0.0, %v561
  %v563 = vpop.f32.mrb[0].mxu0
  %v564 = vpop.f32.mrb[0].mxu0
  %v565 = vpop.f32.mrb[0].mxu0
  %566 = vdwg.mxu0
  %v568 = vrot.slane %v562, 4
  %v570 = vadd.f32 %v121, %v568
  %v571 = vxor.u32 %v570, 2147483648
  %v572 = vmul.f32 %v571, 1.442695
  %v573 = vpow.pop %v572
  %v574 = vadd.f32 %v573, 1.0
  %v575 = vrcp.pop %v574
  %v576 = vmul.f32 1.0, %v575
  %v577 = vmul.f32 %v576, 2.0
  %v578 = vsub.f32 %v577, 1.0
  %v580 = vrot.slane %v513, 4
  %v582 = vmul.f32 %v576, %v580
  %584 = vrot.lane.b32.xlu0 %v578, 64
  %v585 = vpop.permute.xlu0 %584
  %v587 = vmul.f32 %v576, %v585
  %589 = vrot.lane.b32.xlu0 %v587, 32
  %v590 = vpop.permute.xlu0 %589
  %v592 = vadd.f32 %v582, %v590
  %v593 = vtanh.pop %v592
  %595 = vrot.lane.b32.xlu0 %v593, 64
  %v596 = vpop.permute.xlu0 %595
  %v598 = vmul.f32 %v576, %v596
  %v599 = vpack.c.bf16 %v598, %v598
  %v601 = vrot.slane %v599, 2
  %602 = vrot.lane.b32.xlu0 %v601, 32
  %v603 = vpop.permute.xlu0 %602
  %v605 = vsel %vm71, %v603, 0
  %607 = vmatprep.subr.bf16.mxu0 0
  %608 = vmatpush1.bf16.msra.mxu0 %v135
  %609 = vmatprep.subr.bf16.mxu0 0
  %610 = vmatpush1.bf16.msra.mxu0 %v136
  %611 = vmatprep.subr.bf16.mxu0 0
  %612 = vmatpush1.bf16.msra.mxu0 0
  %613 = vmatprep.subr.bf16.mxu0 0
  %614 = vmatpush1.bf16.msra.mxu0 0
  %615 = vmatprep.subr.bf16.mxu0 0
  %616 = vmatpush1.bf16.msra.mxu0 0
  %617 = vmatprep.subr.bf16.mxu0 0
  %618 = vmatpush1.bf16.msra.mxu0 0
  %619 = vmatprep.subr.bf16.mxu0 0
  %620 = vmatpush1.bf16.msra.mxu0 0
  %621 = vmatprep.subr.bf16.mxu0 0
  %622 = vmatpush1.bf16.msra.mxu0 0
  %623 = vmatprep.subr.bf16.mxu0 0
  %624 = vmatpush1.bf16.msra.mxu0 0
  %625 = vmatprep.subr.bf16.mxu0 0
  %626 = vmatpush1.bf16.msra.mxu0 0
  %627 = vmatprep.subr.bf16.mxu0 0
  %628 = vmatpush1.bf16.msra.mxu0 0
  %629 = vmatprep.subr.bf16.mxu0 0
  %630 = vmatpush1.bf16.msra.mxu0 0
  %631 = vmatprep.subr.bf16.mxu0 0
  %632 = vmatpush1.bf16.msra.mxu0 0
  %633 = vmatprep.subr.bf16.mxu0 0
  %634 = vmatpush1.bf16.msra.mxu0 0
  %635 = vmatprep.subr.bf16.mxu0 0
  %636 = vmatpush1.bf16.msra.mxu0 0
  %637 = vmatprep.subr.bf16.mxu0 0
  %638 = vmatpush1.bf16.msra.mxu0 0
  %639 = vmatprep.mubr.bf16.mxu0 0
  %640 = vmatmul.mubr.bf16.gmra.mrb[0].mxu0 %v605
  %v641 = vpop.f32.mrb[0].mxu0
  %v642 = vadd.f32 0.0, %v641
  %v643 = vpop.f32.mrb[0].mxu0
  %v644 = vpop.f32.mrb[0].mxu0
  %v645 = vpop.f32.mrb[0].mxu0
  %646 = vdwg.mxu0
  %v647 = vadd.f32 %v124, %v642
  %v648 = vxor.u32 %v647, 2147483648
  %v649 = vmul.f32 %v648, 1.442695
  %v650 = vpow.pop %v649
  %v651 = vadd.f32 %v650, 1.0
  %v652 = vrcp.pop %v651
  %v653 = vmul.f32 1.0, %v652
  %v654 = vmul.f32 %v653, 2.0
  %v655 = vsub.f32 %v654, 1.0
  %v657 = vrot.slane %v592, 4
  %v659 = vmul.f32 %v653, %v657
  %661 = vrot.lane.b32.xlu0 %v655, 64
  %v662 = vpop.permute.xlu0 %661
  %v664 = vmul.f32 %v653, %v662
  %666 = vrot.lane.b32.xlu0 %v664, 32
  %v667 = vpop.permute.xlu0 %666
  %v669 = vadd.f32 %v659, %v667
  %v670 = vtanh.pop %v669
  %672 = vrot.lane.b32.xlu0 %v670, 64
  %v673 = vpop.permute.xlu0 %672
  %v675 = vmul.f32 %v653, %v673
  %v676 = vpack.c.bf16 %v675, %v675
  %678 = vrot.lane.b32.xlu0 %v676, 32
  %v679 = vpop.permute.xlu0 %678
  %v681 = vsel %vm71, %v679, 0
  %683 = vmatprep.subr.bf16.mxu0 0
  %684 = vmatpush1.bf16.msra.mxu0 %v135
  %685 = vmatprep.subr.bf16.mxu0 0
  %686 = vmatpush1.bf16.msra.mxu0 %v136
  %687 = vmatprep.subr.bf16.mxu0 0
  %688 = vmatpush1.bf16.msra.mxu0 0
  %689 = vmatprep.subr.bf16.mxu0 0
  %690 = vmatpush1.bf16.msra.mxu0 0
  %691 = vmatprep.subr.bf16.mxu0 0
  %692 = vmatpush1.bf16.msra.mxu0 0
  %693 = vmatprep.subr.bf16.mxu0 0
  %694 = vmatpush1.bf16.msra.mxu0 0
  %695 = vmatprep.subr.bf16.mxu0 0
  %696 = vmatpush1.bf16.msra.mxu0 0
  %697 = vmatprep.subr.bf16.mxu0 0
  %698 = vmatpush1.bf16.msra.mxu0 0
  %699 = vmatprep.subr.bf16.mxu0 0
  %700 = vmatpush1.bf16.msra.mxu0 0
  %701 = vmatprep.subr.bf16.mxu0 0
  %702 = vmatpush1.bf16.msra.mxu0 0
  %703 = vmatprep.subr.bf16.mxu0 0
  %704 = vmatpush1.bf16.msra.mxu0 0
  %705 = vmatprep.subr.bf16.mxu0 0
  %706 = vmatpush1.bf16.msra.mxu0 0
  %707 = vmatprep.subr.bf16.mxu0 0
  %708 = vmatpush1.bf16.msra.mxu0 0
  %709 = vmatprep.subr.bf16.mxu0 0
  %710 = vmatpush1.bf16.msra.mxu0 0
  %711 = vmatprep.subr.bf16.mxu0 0
  %712 = vmatpush1.bf16.msra.mxu0 0
  %713 = vmatprep.subr.bf16.mxu0 0
  %714 = vmatpush1.bf16.msra.mxu0 0
  %715 = vmatprep.mubr.bf16.mxu0 0
  %716 = vmatmul.mubr.bf16.gmra.mrb[0].mxu0 %v681
  %v717 = vpop.f32.mrb[0].mxu0
  %v718 = vadd.f32 0.0, %v717
  %v719 = vpop.f32.mrb[0].mxu0
  %v720 = vpop.f32.mrb[0].mxu0
  %v721 = vpop.f32.mrb[0].mxu0
  %722 = vdwg.mxu0
  %v724 = vrot.slane %v718, 4
  %v726 = vadd.f32 %v124, %v724
  %v727 = vxor.u32 %v726, 2147483648
  %v728 = vmul.f32 %v727, 1.442695
  %v729 = vpow.pop %v728
  %v730 = vadd.f32 %v729, 1.0
  %v731 = vrcp.pop %v730
  %v732 = vmul.f32 1.0, %v731
  %v733 = vmul.f32 %v732, 2.0
  %v734 = vsub.f32 %v733, 1.0
  %v736 = vrot.slane %v669, 4
  %v738 = vmul.f32 %v732, %v736
  %740 = vrot.lane.b32.xlu0 %v734, 64
  %v741 = vpop.permute.xlu0 %740
  %v743 = vmul.f32 %v732, %v741
  %745 = vrot.lane.b32.xlu0 %v743, 32
  %v746 = vpop.permute.xlu0 %745
  %v748 = vadd.f32 %v738, %v746
  %v749 = vtanh.pop %v748
  %751 = vrot.lane.b32.xlu0 %v749, 64
  %v752 = vpop.permute.xlu0 %751
  %v754 = vmul.f32 %v732, %v752
  %vm755 = vcmask 1043456
  %v756 = vsel %vm755, %v207, %v286
  %v757 = vsel %vm755, %v363, %v442
  %v758 = vsel %vm755, %v519, %v598
  %v759 = vsel %vm755, %v675, %v754
  %v760 = vld [vmem:[%s4] sm:$0xf]
  %v761 = vld [vmem:[%s4 + $0x4] sm:$0xf]
  %v762 = vld [vmem:[%s4 + $0x8] sm:$0xf]
  %v763 = vld [vmem:[%s4 + $0xc] sm:$0xf]
  %v764 = vld [vmem:[%s5] sm:$0xf]
  %v765 = vld [vmem:[%s5 + $0x4] sm:$0xf]
  %v766 = vld [vmem:[%s5 + $0x8] sm:$0xf]
  %v767 = vld [vmem:[%s5 + $0xc] sm:$0xf]
  %v768 = vld [vmem:[%s6] sm:$0x1]
  %v769 = vpack.c.bf16 %v757, %v756
  %v770 = vpack.c.bf16 %v759, %v758
  %v772 = vlaneseq
  %v773 = vshrl.u32 %v772, 7
  %v774 = vsub.s32 0, %v773
  %v775 = vrot.slane %v768, %v774
  %779 = vrot.lane.b32.xlu0 %v769, 32
  %v780 = vpop.permute.xlu0 %779
  %781 = vrot.lane.b32.xlu0 %v770, 32
  %v782 = vpop.permute.xlu0 %781
  %v787 = vunpack.c.l.b16 %v760
  %v788 = vunpack.c.l.b16 %v761
  %v789 = vunpack.c.l.b16 %v762
  %v790 = vunpack.c.l.b16 %v763
  %v791 = vpack.c.b16 %v788, %v787
  %v792 = vpack.c.b16 %v790, %v789
  %v796 = vsel %vm71, %v780, 0
  %v799 = vsel %vm71, %v782, 0
  %801 = vmatprep.subr.bf16.mxu0 0
  %802 = vmatpush1.bf16.msra.mxu0 %v791
  %803 = vmatprep.subr.bf16.mxu0 0
  %804 = vmatpush1.bf16.msra.mxu0 %v792
  %805 = vmatprep.subr.bf16.mxu0 0
  %806 = vmatpush1.bf16.msra.mxu0 0
  %807 = vmatprep.subr.bf16.mxu0 0
  %808 = vmatpush1.bf16.msra.mxu0 0
  %809 = vmatprep.subr.bf16.mxu0 0
  %810 = vmatpush1.bf16.msra.mxu0 0
  %811 = vmatprep.subr.bf16.mxu0 0
  %812 = vmatpush1.bf16.msra.mxu0 0
  %813 = vmatprep.subr.bf16.mxu0 0
  %814 = vmatpush1.bf16.msra.mxu0 0
  %815 = vmatprep.subr.bf16.mxu0 0
  %816 = vmatpush1.bf16.msra.mxu0 0
  %817 = vmatprep.subr.bf16.mxu0 0
  %818 = vmatpush1.bf16.msra.mxu0 0
  %819 = vmatprep.subr.bf16.mxu0 0
  %820 = vmatpush1.bf16.msra.mxu0 0
  %821 = vmatprep.subr.bf16.mxu0 0
  %822 = vmatpush1.bf16.msra.mxu0 0
  %823 = vmatprep.subr.bf16.mxu0 0
  %824 = vmatpush1.bf16.msra.mxu0 0
  %825 = vmatprep.subr.bf16.mxu0 0
  %826 = vmatpush1.bf16.msra.mxu0 0
  %827 = vmatprep.subr.bf16.mxu0 0
  %828 = vmatpush1.bf16.msra.mxu0 0
  %829 = vmatprep.subr.bf16.mxu0 0
  %830 = vmatpush1.bf16.msra.mxu0 0
  %831 = vmatprep.subr.bf16.mxu0 0
  %832 = vmatpush1.bf16.msra.mxu0 0
  %833 = vmatprep.mubr.bf16.mxu0 0
  %834 = vmatmul.mubr.bf16.gmra.mrb[0].mxu0 %v796
  %v835 = vpop.f32.mrb[0].mxu0
  %v836 = vadd.f32 %v775, %v835
  %v837 = vpop.f32.mrb[0].mxu0
  %v838 = vpop.f32.mrb[0].mxu0
  %v839 = vadd.f32 %v775, %v838
  %v840 = vpop.f32.mrb[0].mxu0
  %841 = vmatprep.mubr.bf16.mxu0 0
  %842 = vmatmul.mubr.bf16.gmra.mrb[0].mxu0 %v799
  %v843 = vpop.f32.mrb[0].mxu0
  %v844 = vadd.f32 %v775, %v843
  %v845 = vpop.f32.mrb[0].mxu0
  %v846 = vpop.f32.mrb[0].mxu0
  %v847 = vadd.f32 %v775, %v846
  %v848 = vpop.f32.mrb[0].mxu0
  %849 = vdwg.mxu0
  %v854 = vunpack.c.l.b16 %v764
  %v855 = vunpack.c.l.b16 %v765
  %v856 = vunpack.c.l.b16 %v766
  %v857 = vunpack.c.l.b16 %v767
  %v858 = vpack.c.b16 %v855, %v854
  %v859 = vpack.c.b16 %v857, %v856
  %862 = vmatprep.subr.bf16.mxu0 0
  %863 = vmatpush1.bf16.msra.mxu0 %v858
  %864 = vmatprep.subr.bf16.mxu0 0
  %865 = vmatpush1.bf16.msra.mxu0 %v859
  %866 = vmatprep.subr.bf16.mxu0 0
  %867 = vmatpush1.bf16.msra.mxu0 0
  %868 = vmatprep.subr.bf16.mxu0 0
  %869 = vmatpush1.bf16.msra.mxu0 0
  %870 = vmatprep.subr.bf16.mxu0 0
  %871 = vmatpush1.bf16.msra.mxu0 0
  %872 = vmatprep.subr.bf16.mxu0 0
  %873 = vmatpush1.bf16.msra.mxu0 0
  %874 = vmatprep.subr.bf16.mxu0 0
  %875 = vmatpush1.bf16.msra.mxu0 0
  %876 = vmatprep.subr.bf16.mxu0 0
  %877 = vmatpush1.bf16.msra.mxu0 0
  %878 = vmatprep.subr.bf16.mxu0 0
  %879 = vmatpush1.bf16.msra.mxu0 0
  %880 = vmatprep.subr.bf16.mxu0 0
  %881 = vmatpush1.bf16.msra.mxu0 0
  %882 = vmatprep.subr.bf16.mxu0 0
  %883 = vmatpush1.bf16.msra.mxu0 0
  %884 = vmatprep.subr.bf16.mxu0 0
  %885 = vmatpush1.bf16.msra.mxu0 0
  %886 = vmatprep.subr.bf16.mxu0 0
  %887 = vmatpush1.bf16.msra.mxu0 0
  %888 = vmatprep.subr.bf16.mxu0 0
  %889 = vmatpush1.bf16.msra.mxu0 0
  %890 = vmatprep.subr.bf16.mxu0 0
  %891 = vmatpush1.bf16.msra.mxu0 0
  %892 = vmatprep.subr.bf16.mxu0 0
  %893 = vmatpush1.bf16.msra.mxu0 0
  %894 = vmatprep.mubr.bf16.mxu0 0
  %895 = vmatmul.mubr.bf16.gmra.mrb[0].mxu0 %v140
  %v896 = vpop.f32.mrb[0].mxu0
  %v897 = vadd.f32 0.0, %v896
  %v898 = vpop.f32.mrb[0].mxu0
  %v899 = vpop.f32.mrb[0].mxu0
  %v900 = vpop.f32.mrb[0].mxu0
  %901 = vdwg.mxu0
  %v902 = vadd.f32 %v836, %v897
  %v903 = vxor.u32 %v902, 2147483648
  %v904 = vmul.f32 %v903, 1.442695
  %v905 = vpow.pop %v904
  %v906 = vadd.f32 %v905, 1.0
  %v907 = vrcp.pop %v906
  %v908 = vmul.f32 1.0, %v907
  %v909 = vmul.f32 %v908, 2.0
  %v910 = vsub.f32 %v909, 1.0
  %v911 = vmul.f32 %v908, 0.0
  %913 = vrot.lane.b32.xlu0 %v910, 64
  %v914 = vpop.permute.xlu0 %913
  %v916 = vmul.f32 %v908, %v914
  %918 = vrot.lane.b32.xlu0 %v916, 32
  %v919 = vpop.permute.xlu0 %918
  %v921 = vadd.f32 %v911, %v919
  %v922 = vtanh.pop %v921
  %924 = vrot.lane.b32.xlu0 %v922, 64
  %v925 = vpop.permute.xlu0 %924
  %v927 = vmul.f32 %v908, %v925
  %v928 = vpack.c.bf16 %v927, %v927
  %930 = vrot.lane.b32.xlu0 %v928, 32
  %v931 = vpop.permute.xlu0 %930
  %v933 = vsel %vm71, %v931, 0
  %935 = vmatprep.subr.bf16.mxu0 0
  %936 = vmatpush1.bf16.msra.mxu0 %v858
  %937 = vmatprep.subr.bf16.mxu0 0
  %938 = vmatpush1.bf16.msra.mxu0 %v859
  %939 = vmatprep.subr.bf16.mxu0 0
  %940 = vmatpush1.bf16.msra.mxu0 0
  %941 = vmatprep.subr.bf16.mxu0 0
  %942 = vmatpush1.bf16.msra.mxu0 0
  %943 = vmatprep.subr.bf16.mxu0 0
  %944 = vmatpush1.bf16.msra.mxu0 0
  %945 = vmatprep.subr.bf16.mxu0 0
  %946 = vmatpush1.bf16.msra.mxu0 0
  %947 = vmatprep.subr.bf16.mxu0 0
  %948 = vmatpush1.bf16.msra.mxu0 0
  %949 = vmatprep.subr.bf16.mxu0 0
  %950 = vmatpush1.bf16.msra.mxu0 0
  %951 = vmatprep.subr.bf16.mxu0 0
  %952 = vmatpush1.bf16.msra.mxu0 0
  %953 = vmatprep.subr.bf16.mxu0 0
  %954 = vmatpush1.bf16.msra.mxu0 0
  %955 = vmatprep.subr.bf16.mxu0 0
  %956 = vmatpush1.bf16.msra.mxu0 0
  %957 = vmatprep.subr.bf16.mxu0 0
  %958 = vmatpush1.bf16.msra.mxu0 0
  %959 = vmatprep.subr.bf16.mxu0 0
  %960 = vmatpush1.bf16.msra.mxu0 0
  %961 = vmatprep.subr.bf16.mxu0 0
  %962 = vmatpush1.bf16.msra.mxu0 0
  %963 = vmatprep.subr.bf16.mxu0 0
  %964 = vmatpush1.bf16.msra.mxu0 0
  %965 = vmatprep.subr.bf16.mxu0 0
  %966 = vmatpush1.bf16.msra.mxu0 0
  %967 = vmatprep.mubr.bf16.mxu0 0
  %968 = vmatmul.mubr.bf16.gmra.mrb[0].mxu0 %v933
  %v969 = vpop.f32.mrb[0].mxu0
  %v970 = vadd.f32 0.0, %v969
  %v971 = vpop.f32.mrb[0].mxu0
  %v972 = vpop.f32.mrb[0].mxu0
  %v973 = vpop.f32.mrb[0].mxu0
  %974 = vdwg.mxu0
  %v976 = vrot.slane %v970, 4
  %v978 = vadd.f32 %v836, %v976
  %v979 = vxor.u32 %v978, 2147483648
  %v980 = vmul.f32 %v979, 1.442695
  %v981 = vpow.pop %v980
  %v982 = vadd.f32 %v981, 1.0
  %v983 = vrcp.pop %v982
  %v984 = vmul.f32 1.0, %v983
  %v985 = vmul.f32 %v984, 2.0
  %v986 = vsub.f32 %v985, 1.0
  %v988 = vrot.slane %v921, 4
  %v990 = vmul.f32 %v984, %v988
  %992 = vrot.lane.b32.xlu0 %v986, 64
  %v993 = vpop.permute.xlu0 %992
  %v995 = vmul.f32 %v984, %v993
  %997 = vrot.lane.b32.xlu0 %v995, 32
  %v998 = vpop.permute.xlu0 %997
  %v1000 = vadd.f32 %v990, %v998
  %v1001 = vtanh.pop %v1000
  %1003 = vrot.lane.b32.xlu0 %v1001, 64
  %v1004 = vpop.permute.xlu0 %1003
  %v1006 = vmul.f32 %v984, %v1004
  %v1007 = vpack.c.bf16 %v1006, %v1006
  %v1009 = vrot.slane %v1007, 2
  %1010 = vrot.lane.b32.xlu0 %v1009, 32
  %v1011 = vpop.permute.xlu0 %1010
  %v1013 = vsel %vm71, %v1011, 0
  %1015 = vmatprep.subr.bf16.mxu0 0
  %1016 = vmatpush1.bf16.msra.mxu0 %v858
  %1017 = vmatprep.subr.bf16.mxu0 0
  %1018 = vmatpush1.bf16.msra.mxu0 %v859
  %1019 = vmatprep.subr.bf16.mxu0 0
  %1020 = vmatpush1.bf16.msra.mxu0 0
  %1021 = vmatprep.subr.bf16.mxu0 0
  %1022 = vmatpush1.bf16.msra.mxu0 0
  %1023 = vmatprep.subr.bf16.mxu0 0
  %1024 = vmatpush1.bf16.msra.mxu0 0
  %1025 = vmatprep.subr.bf16.mxu0 0
  %1026 = vmatpush1.bf16.msra.mxu0 0
  %1027 = vmatprep.subr.bf16.mxu0 0
  %1028 = vmatpush1.bf16.msra.mxu0 0
  %1029 = vmatprep.subr.bf16.mxu0 0
  %1030 = vmatpush1.bf16.msra.mxu0 0
  %1031 = vmatprep.subr.bf16.mxu0 0
  %1032 = vmatpush1.bf16.msra.mxu0 0
  %1033 = vmatprep.subr.bf16.mxu0 0
  %1034 = vmatpush1.bf16.msra.mxu0 0
  %1035 = vmatprep.subr.bf16.mxu0 0
  %1036 = vmatpush1.bf16.msra.mxu0 0
  %1037 = vmatprep.subr.bf16.mxu0 0
  %1038 = vmatpush1.bf16.msra.mxu0 0
  %1039 = vmatprep.subr.bf16.mxu0 0
  %1040 = vmatpush1.bf16.msra.mxu0 0
  %1041 = vmatprep.subr.bf16.mxu0 0
  %1042 = vmatpush1.bf16.msra.mxu0 0
  %1043 = vmatprep.subr.bf16.mxu0 0
  %1044 = vmatpush1.bf16.msra.mxu0 0
  %1045 = vmatprep.subr.bf16.mxu0 0
  %1046 = vmatpush1.bf16.msra.mxu0 0
  %1047 = vmatprep.mubr.bf16.mxu0 0
  %1048 = vmatmul.mubr.bf16.gmra.mrb[0].mxu0 %v1013
  %v1049 = vpop.f32.mrb[0].mxu0
  %v1050 = vadd.f32 0.0, %v1049
  %v1051 = vpop.f32.mrb[0].mxu0
  %v1052 = vpop.f32.mrb[0].mxu0
  %v1053 = vpop.f32.mrb[0].mxu0
  %1054 = vdwg.mxu0
  %v1055 = vadd.f32 %v839, %v1050
  %v1056 = vxor.u32 %v1055, 2147483648
  %v1057 = vmul.f32 %v1056, 1.442695
  %v1058 = vpow.pop %v1057
  %v1059 = vadd.f32 %v1058, 1.0
  %v1060 = vrcp.pop %v1059
  %v1061 = vmul.f32 1.0, %v1060
  %v1062 = vmul.f32 %v1061, 2.0
  %v1063 = vsub.f32 %v1062, 1.0
  %v1065 = vrot.slane %v1000, 4
  %v1067 = vmul.f32 %v1061, %v1065
  %1069 = vrot.lane.b32.xlu0 %v1063, 64
  %v1070 = vpop.permute.xlu0 %1069
  %v1072 = vmul.f32 %v1061, %v1070
  %1074 = vrot.lane.b32.xlu0 %v1072, 32
  %v1075 = vpop.permute.xlu0 %1074
  %v1077 = vadd.f32 %v1067, %v1075
  %v1078 = vtanh.pop %v1077
  %1080 = vrot.lane.b32.xlu0 %v1078, 64
  %v1081 = vpop.permute.xlu0 %1080
  %v1083 = vmul.f32 %v1061, %v1081
  %v1084 = vpack.c.bf16 %v1083, %v1083
  %1086 = vrot.lane.b32.xlu0 %v1084, 32
  %v1087 = vpop.permute.xlu0 %1086
  %v1089 = vsel %vm71, %v1087, 0
  %1091 = vmatprep.subr.bf16.mxu0 0
  %1092 = vmatpush1.bf16.msra.mxu0 %v858
  %1093 = vmatprep.subr.bf16.mxu0 0
  %1094 = vmatpush1.bf16.msra.mxu0 %v859
  %1095 = vmatprep.subr.bf16.mxu0 0
  %1096 = vmatpush1.bf16.msra.mxu0 0
  %1097 = vmatprep.subr.bf16.mxu0 0
  %1098 = vmatpush1.bf16.msra.mxu0 0
  %1099 = vmatprep.subr.bf16.mxu0 0
  %1100 = vmatpush1.bf16.msra.mxu0 0
  %1101 = vmatprep.subr.bf16.mxu0 0
  %1102 = vmatpush1.bf16.msra.mxu0 0
  %1103 = vmatprep.subr.bf16.mxu0 0
  %1104 = vmatpush1.bf16.msra.mxu0 0
  %1105 = vmatprep.subr.bf16.mxu0 0
  %1106 = vmatpush1.bf16.msra.mxu0 0
  %1107 = vmatprep.subr.bf16.mxu0 0
  %1108 = vmatpush1.bf16.msra.mxu0 0
  %1109 = vmatprep.subr.bf16.mxu0 0
  %1110 = vmatpush1.bf16.msra.mxu0 0
  %1111 = vmatprep.subr.bf16.mxu0 0
  %1112 = vmatpush1.bf16.msra.mxu0 0
  %1113 = vmatprep.subr.bf16.mxu0 0
  %1114 = vmatpush1.bf16.msra.mxu0 0
  %1115 = vmatprep.subr.bf16.mxu0 0
  %1116 = vmatpush1.bf16.msra.mxu0 0
  %1117 = vmatprep.subr.bf16.mxu0 0
  %1118 = vmatpush1.bf16.msra.mxu0 0
  %1119 = vmatprep.subr.bf16.mxu0 0
  %1120 = vmatpush1.bf16.msra.mxu0 0
  %1121 = vmatprep.subr.bf16.mxu0 0
  %1122 = vmatpush1.bf16.msra.mxu0 0
  %1123 = vmatprep.mubr.bf16.mxu0 0
  %1124 = vmatmul.mubr.bf16.gmra.mrb[0].mxu0 %v1089
  %v1125 = vpop.f32.mrb[0].mxu0
  %v1126 = vadd.f32 0.0, %v1125
  %v1127 = vpop.f32.mrb[0].mxu0
  %v1128 = vpop.f32.mrb[0].mxu0
  %v1129 = vpop.f32.mrb[0].mxu0
  %1130 = vdwg.mxu0
  %v1132 = vrot.slane %v1126, 4
  %v1134 = vadd.f32 %v839, %v1132
  %v1135 = vxor.u32 %v1134, 2147483648
  %v1136 = vmul.f32 %v1135, 1.442695
  %v1137 = vpow.pop %v1136
  %v1138 = vadd.f32 %v1137, 1.0
  %v1139 = vrcp.pop %v1138
  %v1140 = vmul.f32 1.0, %v1139
  %v1141 = vmul.f32 %v1140, 2.0
  %v1142 = vsub.f32 %v1141, 1.0
  %v1144 = vrot.slane %v1077, 4
  %v1146 = vmul.f32 %v1140, %v1144
  %1148 = vrot.lane.b32.xlu0 %v1142, 64
  %v1149 = vpop.permute.xlu0 %1148
  %v1151 = vmul.f32 %v1140, %v1149
  %1153 = vrot.lane.b32.xlu0 %v1151, 32
  %v1154 = vpop.permute.xlu0 %1153
  %v1156 = vadd.f32 %v1146, %v1154
  %v1157 = vtanh.pop %v1156
  %1159 = vrot.lane.b32.xlu0 %v1157, 64
  %v1160 = vpop.permute.xlu0 %1159
  %v1162 = vmul.f32 %v1140, %v1160
  %v1163 = vpack.c.bf16 %v1162, %v1162
  %v1165 = vrot.slane %v1163, 2
  %1166 = vrot.lane.b32.xlu0 %v1165, 32
  %v1167 = vpop.permute.xlu0 %1166
  %v1169 = vsel %vm71, %v1167, 0
  %1171 = vmatprep.subr.bf16.mxu0 0
  %1172 = vmatpush1.bf16.msra.mxu0 %v858
  %1173 = vmatprep.subr.bf16.mxu0 0
  %1174 = vmatpush1.bf16.msra.mxu0 %v859
  %1175 = vmatprep.subr.bf16.mxu0 0
  %1176 = vmatpush1.bf16.msra.mxu0 0
  %1177 = vmatprep.subr.bf16.mxu0 0
  %1178 = vmatpush1.bf16.msra.mxu0 0
  %1179 = vmatprep.subr.bf16.mxu0 0
  %1180 = vmatpush1.bf16.msra.mxu0 0
  %1181 = vmatprep.subr.bf16.mxu0 0
  %1182 = vmatpush1.bf16.msra.mxu0 0
  %1183 = vmatprep.subr.bf16.mxu0 0
  %1184 = vmatpush1.bf16.msra.mxu0 0
  %1185 = vmatprep.subr.bf16.mxu0 0
  %1186 = vmatpush1.bf16.msra.mxu0 0
  %1187 = vmatprep.subr.bf16.mxu0 0
  %1188 = vmatpush1.bf16.msra.mxu0 0
  %1189 = vmatprep.subr.bf16.mxu0 0
  %1190 = vmatpush1.bf16.msra.mxu0 0
  %1191 = vmatprep.subr.bf16.mxu0 0
  %1192 = vmatpush1.bf16.msra.mxu0 0
  %1193 = vmatprep.subr.bf16.mxu0 0
  %1194 = vmatpush1.bf16.msra.mxu0 0
  %1195 = vmatprep.subr.bf16.mxu0 0
  %1196 = vmatpush1.bf16.msra.mxu0 0
  %1197 = vmatprep.subr.bf16.mxu0 0
  %1198 = vmatpush1.bf16.msra.mxu0 0
  %1199 = vmatprep.subr.bf16.mxu0 0
  %1200 = vmatpush1.bf16.msra.mxu0 0
  %1201 = vmatprep.subr.bf16.mxu0 0
  %1202 = vmatpush1.bf16.msra.mxu0 0
  %1203 = vmatprep.mubr.bf16.mxu0 0
  %1204 = vmatmul.mubr.bf16.gmra.mrb[0].mxu0 %v1169
  %v1205 = vpop.f32.mrb[0].mxu0
  %v1206 = vadd.f32 0.0, %v1205
  %v1207 = vpop.f32.mrb[0].mxu0
  %v1208 = vpop.f32.mrb[0].mxu0
  %v1209 = vpop.f32.mrb[0].mxu0
  %1210 = vdwg.mxu0
  %v1211 = vadd.f32 %v844, %v1206
  %v1212 = vxor.u32 %v1211, 2147483648
  %v1213 = vmul.f32 %v1212, 1.442695
  %v1214 = vpow.pop %v1213
  %v1215 = vadd.f32 %v1214, 1.0
  %v1216 = vrcp.pop %v1215
  %v1217 = vmul.f32 1.0, %v1216
  %v1218 = vmul.f32 %v1217, 2.0
  %v1219 = vsub.f32 %v1218, 1.0
  %v1221 = vrot.slane %v1156, 4
  %v1223 = vmul.f32 %v1217, %v1221
  %1225 = vrot.lane.b32.xlu0 %v1219, 64
  %v1226 = vpop.permute.xlu0 %1225
  %v1228 = vmul.f32 %v1217, %v1226
  %1230 = vrot.lane.b32.xlu0 %v1228, 32
  %v1231 = vpop.permute.xlu0 %1230
  %v1233 = vadd.f32 %v1223, %v1231
  %v1234 = vtanh.pop %v1233
  %1236 = vrot.lane.b32.xlu0 %v1234, 64
  %v1237 = vpop.permute.xlu0 %1236
  %v1239 = vmul.f32 %v1217, %v1237
  %v1240 = vpack.c.bf16 %v1239, %v1239
  %1242 = vrot.lane.b32.xlu0 %v1240, 32
  %v1243 = vpop.permute.xlu0 %1242
  %v1245 = vsel %vm71, %v1243, 0
  %1247 = vmatprep.subr.bf16.mxu0 0
  %1248 = vmatpush1.bf16.msra.mxu0 %v858
  %1249 = vmatprep.subr.bf16.mxu0 0
  %1250 = vmatpush1.bf16.msra.mxu0 %v859
  %1251 = vmatprep.subr.bf16.mxu0 0
  %1252 = vmatpush1.bf16.msra.mxu0 0
  %1253 = vmatprep.subr.bf16.mxu0 0
  %1254 = vmatpush1.bf16.msra.mxu0 0
  %1255 = vmatprep.subr.bf16.mxu0 0
  %1256 = vmatpush1.bf16.msra.mxu0 0
  %1257 = vmatprep.subr.bf16.mxu0 0
  %1258 = vmatpush1.bf16.msra.mxu0 0
  %1259 = vmatprep.subr.bf16.mxu0 0
  %1260 = vmatpush1.bf16.msra.mxu0 0
  %1261 = vmatprep.subr.bf16.mxu0 0
  %1262 = vmatpush1.bf16.msra.mxu0 0
  %1263 = vmatprep.subr.bf16.mxu0 0
  %1264 = vmatpush1.bf16.msra.mxu0 0
  %1265 = vmatprep.subr.bf16.mxu0 0
  %1266 = vmatpush1.bf16.msra.mxu0 0
  %1267 = vmatprep.subr.bf16.mxu0 0
  %1268 = vmatpush1.bf16.msra.mxu0 0
  %1269 = vmatprep.subr.bf16.mxu0 0
  %1270 = vmatpush1.bf16.msra.mxu0 0
  %1271 = vmatprep.subr.bf16.mxu0 0
  %1272 = vmatpush1.bf16.msra.mxu0 0
  %1273 = vmatprep.subr.bf16.mxu0 0
  %1274 = vmatpush1.bf16.msra.mxu0 0
  %1275 = vmatprep.subr.bf16.mxu0 0
  %1276 = vmatpush1.bf16.msra.mxu0 0
  %1277 = vmatprep.subr.bf16.mxu0 0
  %1278 = vmatpush1.bf16.msra.mxu0 0
  %1279 = vmatprep.mubr.bf16.mxu0 0
  %1280 = vmatmul.mubr.bf16.gmra.mrb[0].mxu0 %v1245
  %v1281 = vpop.f32.mrb[0].mxu0
  %v1282 = vadd.f32 0.0, %v1281
  %v1283 = vpop.f32.mrb[0].mxu0
  %v1284 = vpop.f32.mrb[0].mxu0
  %v1285 = vpop.f32.mrb[0].mxu0
  %1286 = vdwg.mxu0
  %v1288 = vrot.slane %v1282, 4
  %v1290 = vadd.f32 %v844, %v1288
  %v1291 = vxor.u32 %v1290, 2147483648
  %v1292 = vmul.f32 %v1291, 1.442695
  %v1293 = vpow.pop %v1292
  %v1294 = vadd.f32 %v1293, 1.0
  %v1295 = vrcp.pop %v1294
  %v1296 = vmul.f32 1.0, %v1295
  %v1297 = vmul.f32 %v1296, 2.0
  %v1298 = vsub.f32 %v1297, 1.0
  %v1300 = vrot.slane %v1233, 4
  %v1302 = vmul.f32 %v1296, %v1300
  %1304 = vrot.lane.b32.xlu0 %v1298, 64
  %v1305 = vpop.permute.xlu0 %1304
  %v1307 = vmul.f32 %v1296, %v1305
  %1309 = vrot.lane.b32.xlu0 %v1307, 32
  %v1310 = vpop.permute.xlu0 %1309
  %v1312 = vadd.f32 %v1302, %v1310
  %v1313 = vtanh.pop %v1312
  %1315 = vrot.lane.b32.xlu0 %v1313, 64
  %v1316 = vpop.permute.xlu0 %1315
  %v1318 = vmul.f32 %v1296, %v1316
  %v1319 = vpack.c.bf16 %v1318, %v1318
  %v1321 = vrot.slane %v1319, 2
  %1322 = vrot.lane.b32.xlu0 %v1321, 32
  %v1323 = vpop.permute.xlu0 %1322
  %v1325 = vsel %vm71, %v1323, 0
  %1327 = vmatprep.subr.bf16.mxu0 0
  %1328 = vmatpush1.bf16.msra.mxu0 %v858
  %1329 = vmatprep.subr.bf16.mxu0 0
  %1330 = vmatpush1.bf16.msra.mxu0 %v859
  %1331 = vmatprep.subr.bf16.mxu0 0
  %1332 = vmatpush1.bf16.msra.mxu0 0
  %1333 = vmatprep.subr.bf16.mxu0 0
  %1334 = vmatpush1.bf16.msra.mxu0 0
  %1335 = vmatprep.subr.bf16.mxu0 0
  %1336 = vmatpush1.bf16.msra.mxu0 0
  %1337 = vmatprep.subr.bf16.mxu0 0
  %1338 = vmatpush1.bf16.msra.mxu0 0
  %1339 = vmatprep.subr.bf16.mxu0 0
  %1340 = vmatpush1.bf16.msra.mxu0 0
  %1341 = vmatprep.subr.bf16.mxu0 0
  %1342 = vmatpush1.bf16.msra.mxu0 0
  %1343 = vmatprep.subr.bf16.mxu0 0
  %1344 = vmatpush1.bf16.msra.mxu0 0
  %1345 = vmatprep.subr.bf16.mxu0 0
  %1346 = vmatpush1.bf16.msra.mxu0 0
  %1347 = vmatprep.subr.bf16.mxu0 0
  %1348 = vmatpush1.bf16.msra.mxu0 0
  %1349 = vmatprep.subr.bf16.mxu0 0
  %1350 = vmatpush1.bf16.msra.mxu0 0
  %1351 = vmatprep.subr.bf16.mxu0 0
  %1352 = vmatpush1.bf16.msra.mxu0 0
  %1353 = vmatprep.subr.bf16.mxu0 0
  %1354 = vmatpush1.bf16.msra.mxu0 0
  %1355 = vmatprep.subr.bf16.mxu0 0
  %1356 = vmatpush1.bf16.msra.mxu0 0
  %1357 = vmatprep.subr.bf16.mxu0 0
  %1358 = vmatpush1.bf16.msra.mxu0 0
  %1359 = vmatprep.mubr.bf16.mxu0 0
  %1360 = vmatmul.mubr.bf16.gmra.mrb[0].mxu0 %v1325
  %v1361 = vpop.f32.mrb[0].mxu0
  %v1362 = vadd.f32 0.0, %v1361
  %v1363 = vpop.f32.mrb[0].mxu0
  %v1364 = vpop.f32.mrb[0].mxu0
  %v1365 = vpop.f32.mrb[0].mxu0
  %1366 = vdwg.mxu0
  %v1367 = vadd.f32 %v847, %v1362
  %v1368 = vxor.u32 %v1367, 2147483648
  %v1369 = vmul.f32 %v1368, 1.442695
  %v1370 = vpow.pop %v1369
  %v1371 = vadd.f32 %v1370, 1.0
  %v1372 = vrcp.pop %v1371
  %v1373 = vmul.f32 1.0, %v1372
  %v1374 = vmul.f32 %v1373, 2.0
  %v1375 = vsub.f32 %v1374, 1.0
  %v1377 = vrot.slane %v1312, 4
  %v1379 = vmul.f32 %v1373, %v1377
  %1381 = vrot.lane.b32.xlu0 %v1375, 64
  %v1382 = vpop.permute.xlu0 %1381
  %v1384 = vmul.f32 %v1373, %v1382
  %1386 = vrot.lane.b32.xlu0 %v1384, 32
  %v1387 = vpop.permute.xlu0 %1386
  %v1389 = vadd.f32 %v1379, %v1387
  %v1390 = vtanh.pop %v1389
  %1392 = vrot.lane.b32.xlu0 %v1390, 64
  %v1393 = vpop.permute.xlu0 %1392
  %v1395 = vmul.f32 %v1373, %v1393
  %v1396 = vpack.c.bf16 %v1395, %v1395
  %1398 = vrot.lane.b32.xlu0 %v1396, 32
  %v1399 = vpop.permute.xlu0 %1398
  %v1401 = vsel %vm71, %v1399, 0
  %1403 = vmatprep.subr.bf16.mxu0 0
  %1404 = vmatpush1.bf16.msra.mxu0 %v858
  %1405 = vmatprep.subr.bf16.mxu0 0
  %1406 = vmatpush1.bf16.msra.mxu0 %v859
  %1407 = vmatprep.subr.bf16.mxu0 0
  %1408 = vmatpush1.bf16.msra.mxu0 0
  %1409 = vmatprep.subr.bf16.mxu0 0
  %1410 = vmatpush1.bf16.msra.mxu0 0
  %1411 = vmatprep.subr.bf16.mxu0 0
  %1412 = vmatpush1.bf16.msra.mxu0 0
  %1413 = vmatprep.subr.bf16.mxu0 0
  %1414 = vmatpush1.bf16.msra.mxu0 0
  %1415 = vmatprep.subr.bf16.mxu0 0
  %1416 = vmatpush1.bf16.msra.mxu0 0
  %1417 = vmatprep.subr.bf16.mxu0 0
  %1418 = vmatpush1.bf16.msra.mxu0 0
  %1419 = vmatprep.subr.bf16.mxu0 0
  %1420 = vmatpush1.bf16.msra.mxu0 0
  %1421 = vmatprep.subr.bf16.mxu0 0
  %1422 = vmatpush1.bf16.msra.mxu0 0
  %1423 = vmatprep.subr.bf16.mxu0 0
  %1424 = vmatpush1.bf16.msra.mxu0 0
  %1425 = vmatprep.subr.bf16.mxu0 0
  %1426 = vmatpush1.bf16.msra.mxu0 0
  %1427 = vmatprep.subr.bf16.mxu0 0
  %1428 = vmatpush1.bf16.msra.mxu0 0
  %1429 = vmatprep.subr.bf16.mxu0 0
  %1430 = vmatpush1.bf16.msra.mxu0 0
  %1431 = vmatprep.subr.bf16.mxu0 0
  %1432 = vmatpush1.bf16.msra.mxu0 0
  %1433 = vmatprep.subr.bf16.mxu0 0
  %1434 = vmatpush1.bf16.msra.mxu0 0
  %1435 = vmatprep.mubr.bf16.mxu0 0
  %1436 = vmatmul.mubr.bf16.gmra.mrb[0].mxu0 %v1401
  %v1437 = vpop.f32.mrb[0].mxu0
  %v1438 = vadd.f32 0.0, %v1437
  %v1439 = vpop.f32.mrb[0].mxu0
  %v1440 = vpop.f32.mrb[0].mxu0
  %v1441 = vpop.f32.mrb[0].mxu0
  %1442 = vdwg.mxu0
  %v1444 = vrot.slane %v1438, 4
  %v1446 = vadd.f32 %v847, %v1444
  %v1447 = vxor.u32 %v1446, 2147483648
  %v1448 = vmul.f32 %v1447, 1.442695
  %v1449 = vpow.pop %v1448
  %v1450 = vadd.f32 %v1449, 1.0
  %v1451 = vrcp.pop %v1450
  %v1452 = vmul.f32 1.0, %v1451
  %v1453 = vmul.f32 %v1452, 2.0
  %v1454 = vsub.f32 %v1453, 1.0
  %v1456 = vrot.slane %v1389, 4
  %v1458 = vmul.f32 %v1452, %v1456
  %1460 = vrot.lane.b32.xlu0 %v1454, 64
  %v1461 = vpop.permute.xlu0 %1460
  %v1463 = vmul.f32 %v1452, %v1461
  %1465 = vrot.lane.b32.xlu0 %v1463, 32
  %v1466 = vpop.permute.xlu0 %1465
  %v1468 = vadd.f32 %v1458, %v1466
  %v1469 = vtanh.pop %v1468
  %1471 = vrot.lane.b32.xlu0 %v1469, 64
  %v1472 = vpop.permute.xlu0 %1471
  %v1474 = vmul.f32 %v1452, %v1472
  %v1475 = vsel %vm755, %v927, %v1006
  %v1476 = vsel %vm755, %v1083, %v1162
  %v1477 = vsel %vm755, %v1239, %v1318
  %v1478 = vsel %vm755, %v1395, %v1474
  %v1479 = vpack.c.bf16 %v1476, %v1475
  %v1480 = vpack.c.bf16 %v1478, %v1477
  %v1482 = vlaneseq
  %v1483 = vshrl.u32 %v1482, 7
  %v1484 = vsub.s32 0, %v1483
  %v1485 = vrot.slane %v37, %v1484
  %1489 = vrot.lane.b32.xlu0 %v1479, 32
  %v1490 = vpop.permute.xlu0 %1489
  %1491 = vrot.lane.b32.xlu0 %v1480, 32
  %v1492 = vpop.permute.xlu0 %1491
  %v1497 = vunpack.c.l.b16 %v33
  %v1498 = vunpack.c.l.b16 %v34
  %v1499 = vunpack.c.l.b16 %v35
  %v1500 = vunpack.c.l.b16 %v36
  %v1501 = vpack.c.b16 %v1498, %v1497
  %v1502 = vpack.c.b16 %v1500, %v1499
  %v1506 = vsel %vm71, %v1490, 0
  %v1509 = vsel %vm71, %v1492, 0
  %1511 = vmatprep.subr.bf16.mxu0 0
  %1512 = vmatpush1.bf16.msra.mxu0 %v1501
  %1513 = vmatprep.subr.bf16.mxu0 0
  %1514 = vmatpush1.bf16.msra.mxu0 %v1502
  %1515 = vmatprep.subr.bf16.mxu0 0
  %1516 = vmatpush1.bf16.msra.mxu0 0
  %1517 = vmatprep.subr.bf16.mxu0 0
  %1518 = vmatpush1.bf16.msra.mxu0 0
  %1519 = vmatprep.subr.bf16.mxu0 0
  %1520 = vmatpush1.bf16.msra.mxu0 0
  %1521 = vmatprep.subr.bf16.mxu0 0
  %1522 = vmatpush1.bf16.msra.mxu0 0
  %1523 = vmatprep.subr.bf16.mxu0 0
  %1524 = vmatpush1.bf16.msra.mxu0 0
  %1525 = vmatprep.subr.bf16.mxu0 0
  %1526 = vmatpush1.bf16.msra.mxu0 0
  %1527 = vmatprep.subr.bf16.mxu0 0
  %1528 = vmatpush1.bf16.msra.mxu0 0
  %1529 = vmatprep.subr.bf16.mxu0 0
  %1530 = vmatpush1.bf16.msra.mxu0 0
  %1531 = vmatprep.subr.bf16.mxu0 0
  %1532 = vmatpush1.bf16.msra.mxu0 0
  %1533 = vmatprep.subr.bf16.mxu0 0
  %1534 = vmatpush1.bf16.msra.mxu0 0
  %1535 = vmatprep.subr.bf16.mxu0 0
  %1536 = vmatpush1.bf16.msra.mxu0 0
  %1537 = vmatprep.subr.bf16.mxu0 0
  %1538 = vmatpush1.bf16.msra.mxu0 0
  %1539 = vmatprep.subr.bf16.mxu0 0
  %1540 = vmatpush1.bf16.msra.mxu0 0
  %1541 = vmatprep.subr.bf16.mxu0 0
  %1542 = vmatpush1.bf16.msra.mxu0 0
  %1543 = vmatprep.mubr.bf16.mxu0 0
  %1544 = vmatmul.mubr.bf16.gmra.mrb[0].mxu0 %v1506
  %v1545 = vpop.f32.mrb[0].mxu0
  %v1546 = vadd.f32 %v1485, %v1545
  %v1547 = vpop.f32.mrb[0].mxu0
  %v1548 = vpop.f32.mrb[0].mxu0
  %v1549 = vadd.f32 %v1485, %v1548
  %v1550 = vpop.f32.mrb[0].mxu0
  %1551 = vmatprep.mubr.bf16.mxu0 0
  %1552 = vmatmul.mubr.bf16.gmra.mrb[0].mxu0 %v1509
  %v1553 = vpop.f32.mrb[0].mxu0
  %v1554 = vadd.f32 %v1485, %v1553
  %v1555 = vpop.f32.mrb[0].mxu0
  %v1556 = vpop.f32.mrb[0].mxu0
  %v1557 = vadd.f32 %v1485, %v1556
  %v1558 = vpop.f32.mrb[0].mxu0
  %1559 = vdwg.mxu0
  %1560 = vst [vmem:[%s9] sm:$0xff] %v1546
  %1561 = vst [vmem:[%s9 + $0x8] sm:$0xff] %v1549
  %1562 = vst [vmem:[%s9 + $0x10] sm:$0xff] %v1554
  %1563 = vst [vmem:[%s9 + $0x18] sm:$0xff] %v1557
  // Predicated region
  $region38: #{decoder_forward.1} parent=0 // pred_check
    _
  $region39: #{decoder_forward.1} parent=0 // pred_check_branch
    %1565 = sbr.rel (0) target = $region41
  $region40: #{decoder_forward.1} parent=0 // pred_region
    _
  $region41: #{decoder_forward.1} parent=0 // pred_fallthru
    _
  // Predicated region
  $region42: #{decoder_forward.1} parent=0 // pred_check
    _
  $region43: #{decoder_forward.1} parent=0 // pred_check_branch
    %1567 = sbr.rel (0) target = $region45
  $region44: #{decoder_forward.1} parent=0 // pred_region
    _
  $region45: #{decoder_forward.1} parent=0 // pred_fallthru
    _

</llo_original>
